<compile_context>
chip_gen: v7x
topology: tpu7x:2x2x1
jax: 0.10.0
libtpu: 0.0.40
codegen_flags: <defaults>
</compile_context>

<pallas_src>
import jax
import jax.numpy as jnp
from jax.experimental import pallas as pl
from jax.experimental.pallas import tpu as pltpu


def _round_up(x, m):
    return (x + m - 1) // m * m


def _bottleneck_kernel(x_ref, w1_ref, b1_ref, w2_ref, b2_ref, o_ref):
    x = x_ref[0]                                  # (C, tl), io dtype
    xr = x.astype(jnp.float32)                    # residual path in f32
    cdt = w1_ref.dtype                            # MXU compute dtype (bf16/f32)

    # layer_in: 1x1 conv (BN scale folded into rows of w1) -> +bias -> SiLU
    h = jnp.dot(w1_ref[...], x.astype(cdt),
                preferred_element_type=jnp.float32)        # (Cbp, tl) f32
    h = h + b1_ref[...]
    h = h * (1.0 / (1.0 + jnp.exp(-h)))                    # SiLU (exp -> EUP)

    # layer_out: 1x1 conv (BN-folded) -> +bias -> SiLU
    y = jnp.dot(w2_ref[...], h.astype(cdt),
                preferred_element_type=jnp.float32)        # (C, tl) f32
    y = y + b2_ref[...]
    y = y * (1.0 / (1.0 + jnp.exp(-y)))

    # residual add, write NCL block
    o_ref[0] = (y + xr).astype(o_ref.dtype)


def bottleneck_forward(x, params, *, compute_dtype=jnp.bfloat16, io_dtype=None):
    """x: (N, C, L) float array in the PyTorch NCL layout.

    compute_dtype: dtype of the MXU matmul operands (f32 accumulation always).
    io_dtype: dtype activations stream through HBM in (defaults to
      compute_dtype).  In a real model the producer should already emit this
      dtype; here the wrapper casts if needed.
    """
    if io_dtype is None:
        io_dtype = compute_dtype
    N, C, L = x.shape
    w1, w2 = params["w1"], params["w2"]           # (Cb, C), (C, Cb) = (out, in)
    Cb = w1.shape[0]
    assert w1.shape == (Cb, C) and w2.shape == (C, Cb)
    eps = 1e-5

    # ---- fold eval-mode BN into per-out-channel weight scale + bias ---------
    s1 = params["gamma1"] / jnp.sqrt(params["var1"] + eps)
    b1 = params["beta1"] - params["mean1"] * s1
    s2 = params["gamma2"] / jnp.sqrt(params["var2"] + eps)
    b2 = params["beta2"] - params["mean2"] * s2

    # bottleneck channels padded to a lane/MXU-friendly multiple of 128; the
    # zero weight rows/cols + zero bias contribute exactly nothing (SiLU(0)=0)
    Cbp = _round_up(Cb, 128)
    w1k = jnp.pad(w1 * s1[:, None], ((0, Cbp - Cb), (0, 0))).astype(compute_dtype)  # (Cbp, C)
    w2k = jnp.pad(w2 * s2[:, None], ((0, 0), (0, Cbp - Cb))).astype(compute_dtype)  # (C, Cbp)
    b1k = jnp.pad(b1, (0, Cbp - Cb)).reshape(Cbp, 1).astype(jnp.float32)
    b2k = b2.reshape(C, 1).astype(jnp.float32)

    x_io = x.astype(io_dtype)

    # ---- L tiling: lane axis, multiple of 128 when possible; >= 2 grid steps
    if L % 128 != 0:
        tl = L                                    # full-L lane tile (small/odd L)
    else:
        tl = 512 if L % 512 == 0 else (256 if L % 256 == 0 else 128)
        while N * (L // tl) < 2 and tl % 256 == 0:
            tl //= 2                              # keep both v7x cores busy

    # ---- VMEM budget: x/out double-buffered, single resident weight copy,
    #      f32 intermediates + MXU-dtype casts + f32 residual copy included
    io_b = jnp.dtype(io_dtype).itemsize
    w_b = jnp.dtype(compute_dtype).itemsize

    def vmem_need(t):
        act = C * t
        return int(
            2 * act * io_b + 2 * act * io_b       # x / out tiles, 2 buffers each
            + 2 * C * Cbp * w_b                   # w1k + w2k (single copy)
            + (Cbp + C) * 128 * 4                 # biases (lane-padded VMEM tiles)
            + (Cbp + C) * t * 4                   # f32 intermediates h, y
            + (Cbp + C) * t * w_b                 # casts feeding the MXU
            + act * 4)                            # f32 residual copy of x

    try:
        phys = int(pltpu.get_tpu_info().vmem_capacity_bytes)
    except Exception:
        phys = 64 << 20                           # v7x-safe fallback
    budget = int(phys * 0.85)
    while tl % 256 == 0 and vmem_need(tl) + (4 << 20) > budget:
        tl //= 2
    vmem_limit = max(16 << 20, min(vmem_need(tl) + (8 << 20), budget))

    grid = (N, L // tl)
    cost = pl.CostEstimate(
        flops=int(4 * N * L * C * Cbp),                   # two matmuls
        transcendentals=int(N * L * (C + Cbp)),           # two sigmoids
        bytes_accessed=int(2 * N * C * L * io_b + 2 * C * Cbp * w_b
                           + (C + Cbp) * 4),
    )

    def build(single_buffer_params):
        pm = {"pipeline_mode": pl.Buffered(1)} if single_buffer_params else {}
        const = lambda n, l: (0, 0)
        xmap = lambda n, l: (n, 0, l)
        return pl.pallas_call(
            _bottleneck_kernel,
            out_shape=jax.ShapeDtypeStruct((N, C, L), io_dtype),
            grid_spec=pltpu.PrefetchScalarGridSpec(
                num_scalar_prefetch=0,
                grid=grid,
                in_specs=[
                    pl.BlockSpec((1, C, tl), xmap),        # x: NCL, L on lanes
                    pl.BlockSpec((Cbp, C), const, **pm),   # w1 (BN-folded)
                    pl.BlockSpec((Cbp, 1), const, **pm),   # bias1
                    pl.BlockSpec((C, Cbp), const, **pm),   # w2 (BN-folded)
                    pl.BlockSpec((C, 1), const, **pm),     # bias2
                ],
                out_specs=pl.BlockSpec((1, C, tl), xmap),
            ),
            compiler_params=pltpu.CompilerParams(
                dimension_semantics=("parallel", "parallel"),
                vmem_limit_bytes=vmem_limit),
            cost_estimate=cost,
        )

    try:
        return build(True)(x_io, w1k, b1k, w2k, b2k)
    except Exception:
        # Fallback for JAX versions that reject BlockSpec(pipeline_mode=...):
        # default double-buffered parameter blocks (constant index maps, so
        # they are still DMA'd only once; only the VMEM footprint grows).
        return build(False)(x_io, w1k, b1k, w2k, b2k)


def init_params(key, in_channels):
    """Parameters matching the PyTorch module (Conv1d weight = (out, in, 1),
    stored here squeezed to (out, in)); BN stats randomized to exercise the
    eval-mode folding."""
    bottleneck = in_channels // 2
    k = jax.random.split(key, 10)
    w1 = (jax.random.normal(k[0], (bottleneck, in_channels), jnp.float32)
          * (1.0 / jnp.sqrt(in_channels)))
    w2 = (jax.random.normal(k[1], (in_channels, bottleneck), jnp.float32)
          * (1.0 / jnp.sqrt(bottleneck)))

    def bn(keys, n):
        g = 1.0 + 0.1 * jax.random.normal(keys[0], (n,), jnp.float32)
        b = 0.1 * jax.random.normal(keys[1], (n,), jnp.float32)
        m = 0.1 * jax.random.normal(keys[2], (n,), jnp.float32)
        v = 0.5 + jax.random.uniform(keys[3], (n,), jnp.float32)
        return g, b, m, v

    g1, be1, m1, v1 = bn(k[2:6], bottleneck)
    g2, be2, m2, v2 = bn(k[6:10], in_channels)
    return {
        "w1": w1, "gamma1": g1, "beta1": be1, "mean1": m1, "var1": v1,
        "w2": w2, "gamma2": g2, "beta2": be2, "mean2": m2, "var2": v2,
    }


def _reference(x, params):
    """Pure-JAX reference of the eval-mode Bottleneck forward (NCL layout)."""
    eps = 1e-5
    silu = lambda v: v * (1.0 / (1.0 + jnp.exp(-v)))

    def bn(v, g, b, m, var):
        return ((v - m[None, :, None]) / jnp.sqrt(var[None, :, None] + eps)
                * g[None, :, None] + b[None, :, None])

    h = jnp.einsum("oc,ncl->nol", params["w1"], x)
    h = silu(bn(h, params["gamma1"], params["beta1"],
                params["mean1"], params["var1"]))
    y = jnp.einsum("oc,ncl->nol", params["w2"], h)
    y = silu(bn(y, params["gamma2"], params["beta2"],
                params["mean2"], params["var2"]))
    return y + x


if __name__ == "__main__":
    key = jax.random.PRNGKey(0)
    kx, kp = jax.random.split(key)

    N, C, L = 2, 8, 16                    # batch, in_channels, sequence length
    x = jax.random.normal(kx, (N, C, L), jnp.float32)
    params = init_params(kp, C)

    ref = _reference(x, params)

    # exact-semantics check: f32 matmuls, f32 activation streaming
    out_f32 = jax.block_until_ready(
        bottleneck_forward(x, params, compute_dtype=jnp.float32))
    assert out_f32.shape == (N, C, L) and out_f32.dtype == jnp.float32
    assert jnp.allclose(out_f32, ref, atol=1e-4, rtol=1e-4)

    # default fast path: bf16 MXU matmuls + bf16 activation I/O, f32 accum
    out = jax.block_until_ready(bottleneck_forward(x, params))
    assert out.shape == (N, C, L)
    assert jnp.allclose(out.astype(jnp.float32), ref, atol=6e-2, rtol=6e-2)

    print("KERNEL_OK")
</pallas_src>

<mosaic_0001>
module attributes {stable_mosaic.version = 11 : i64} {
  func.func @_bottleneck_kernel(%arg0: i32, %arg1: i32, %arg2: memref<1x8x16xf32, #tpu.memory_space<vmem>>, %arg3: memref<128x8xf32, #tpu.memory_space<vmem>>, %arg4: memref<128x1xf32, #tpu.memory_space<vmem>>, %arg5: memref<8x128xf32, #tpu.memory_space<vmem>>, %arg6: memref<8x1xf32, #tpu.memory_space<vmem>>, %arg7: memref<1x8x16xf32, #tpu.memory_space<vmem>>) attributes {dimension_semantics = [#tpu.dimension_semantics<parallel>, #tpu.dimension_semantics<parallel>], iteration_bounds = array<i64: 2, 1>, scalar_prefetch = 0 : i64, scratch_operands = 0 : i64, tpu.core_type = #tpu.core_type<tc>, window_params = [{transform_indices = @transform_0, window_bounds = array<i64: 1, 8, 16>}, {pipeline_mode = #tpu.pipeline_mode<synchronous>, transform_indices = @transform_1, window_bounds = array<i64: 128, 8>}, {pipeline_mode = #tpu.pipeline_mode<synchronous>, transform_indices = @transform_2, window_bounds = array<i64: 128, 1>}, {pipeline_mode = #tpu.pipeline_mode<synchronous>, transform_indices = @transform_3, window_bounds = array<i64: 8, 128>}, {pipeline_mode = #tpu.pipeline_mode<synchronous>, transform_indices = @transform_4, window_bounds = array<i64: 8, 1>}, {transform_indices = @transform_5, window_bounds = array<i64: 1, 8, 16>}]} {
    %c0 = arith.constant 0 : index
    %c0_0 = arith.constant 0 : index
    %c0_1 = arith.constant 0 : index
    %0 = vector.load %arg2[%c0, %c0_0, %c0_1] : memref<1x8x16xf32, #tpu.memory_space<vmem>>, vector<1x8x16xf32>
    %1 = vector.shape_cast %0 : vector<1x8x16xf32> to vector<8x16xf32>
    %c0_2 = arith.constant 0 : index
    %c0_3 = arith.constant 0 : index
    %2 = vector.load %arg3[%c0_2, %c0_3] : memref<128x8xf32, #tpu.memory_space<vmem>>, vector<128x8xf32>
    %cst = arith.constant dense<0.000000e+00> : vector<128x16xf32>
    %3 = tpu.matmul %2, %1, %cst {dimension_numbers = #tpu.dot_dimension_numbers<[1], [0], [0], [1], [0, 0, 1, 1], [], []>} : vector<128x8xf32>, vector<8x16xf32>, vector<128x16xf32> -> vector<128x16xf32>
    %c0_4 = arith.constant 0 : index
    %c0_5 = arith.constant 0 : index
    %4 = vector.load %arg4[%c0_4, %c0_5] : memref<128x1xf32, #tpu.memory_space<vmem>>, vector<128x1xf32>
    %5 = vector.broadcast %4 : vector<128x1xf32> to vector<128x16xf32>
    %6 = arith.addf %3, %5 : vector<128x16xf32>
    %cst_6 = arith.constant 0.000000e+00 : f32
    %7 = vector.broadcast %cst_6 : f32 to vector<128x16xf32>
    %8 = arith.subf %7, %6 : vector<128x16xf32>
    %9 = math.exp %8 : vector<128x16xf32>
    %cst_7 = arith.constant 1.000000e+00 : f32
    %10 = vector.broadcast %cst_7 : f32 to vector<128x16xf32>
    %11 = arith.addf %10, %9 : vector<128x16xf32>
    %cst_8 = arith.constant 1.000000e+00 : f32
    %12 = vector.broadcast %cst_8 : f32 to vector<128x16xf32>
    %13 = arith.divf %12, %11 : vector<128x16xf32>
    %14 = arith.mulf %6, %13 : vector<128x16xf32>
    %c0_9 = arith.constant 0 : index
    %c0_10 = arith.constant 0 : index
    %15 = vector.load %arg5[%c0_9, %c0_10] : memref<8x128xf32, #tpu.memory_space<vmem>>, vector<8x128xf32>
    %cst_11 = arith.constant dense<0.000000e+00> : vector<8x16xf32>
    %16 = tpu.matmul %15, %14, %cst_11 {dimension_numbers = #tpu.dot_dimension_numbers<[1], [0], [0], [1], [0, 0, 1, 1], [], []>} : vector<8x128xf32>, vector<128x16xf32>, vector<8x16xf32> -> vector<8x16xf32>
    %c0_12 = arith.constant 0 : index
    %c0_13 = arith.constant 0 : index
    %17 = vector.load %arg6[%c0_12, %c0_13] : memref<8x1xf32, #tpu.memory_space<vmem>>, vector<8x1xf32>
    %18 = vector.broadcast %17 : vector<8x1xf32> to vector<8x16xf32>
    %19 = arith.addf %16, %18 : vector<8x16xf32>
    %cst_14 = arith.constant 0.000000e+00 : f32
    %20 = vector.broadcast %cst_14 : f32 to vector<8x16xf32>
    %21 = arith.subf %20, %19 : vector<8x16xf32>
    %22 = math.exp %21 : vector<8x16xf32>
    %cst_15 = arith.constant 1.000000e+00 : f32
    %23 = vector.broadcast %cst_15 : f32 to vector<8x16xf32>
    %24 = arith.addf %23, %22 : vector<8x16xf32>
    %cst_16 = arith.constant 1.000000e+00 : f32
    %25 = vector.broadcast %cst_16 : f32 to vector<8x16xf32>
    %26 = arith.divf %25, %24 : vector<8x16xf32>
    %27 = arith.mulf %19, %26 : vector<8x16xf32>
    %28 = arith.addf %27, %1 : vector<8x16xf32>
    %c0_17 = arith.constant 0 : index
    %c0_18 = arith.constant 0 : index
    %c0_19 = arith.constant 0 : index
    %29 = vector.load %arg7[%c0_17, %c0_18, %c0_19] : memref<1x8x16xf32, #tpu.memory_space<vmem>>, vector<1x8x16xf32>
    %30 = vector.shape_cast %29 : vector<1x8x16xf32> to vector<8x16xf32>
    %31 = vector.shape_cast %28 : vector<8x16xf32> to vector<1x8x16xf32>
    tpu.vector_store %arg7[%c0_17, %c0_18, %c0_19], %31 {strides = array<i32>} : memref<1x8x16xf32, #tpu.memory_space<vmem>>, vector<1x8x16xf32>,
    return
  }
  func.func @transform_0(%arg0: i32, %arg1: i32) -> (i32, i32, i32) {
    %c0_i32 = arith.constant 0 : i32
    %c0_i32_0 = arith.constant 0 : i32
    return %arg0, %c0_i32, %arg1 : i32, i32, i32
  }
  func.func @transform_1(%arg0: i32, %arg1: i32) -> (i32, i32) {
    %c0_i32 = arith.constant 0 : i32
    %c0_i32_0 = arith.constant 0 : i32
    %c0_i32_1 = arith.constant 0 : i32
    return %c0_i32, %c0_i32_0 : i32, i32
  }
  func.func @transform_2(%arg0: i32, %arg1: i32) -> (i32, i32) {
    %c0_i32 = arith.constant 0 : i32
    %c0_i32_0 = arith.constant 0 : i32
    %c0_i32_1 = arith.constant 0 : i32
    return %c0_i32, %c0_i32_0 : i32, i32
  }
  func.func @transform_3(%arg0: i32, %arg1: i32) -> (i32, i32) {
    %c0_i32 = arith.constant 0 : i32
    %c0_i32_0 = arith.constant 0 : i32
    %c0_i32_1 = arith.constant 0 : i32
    return %c0_i32, %c0_i32_0 : i32, i32
  }
  func.func @transform_4(%arg0: i32, %arg1: i32) -> (i32, i32) {
    %c0_i32 = arith.constant 0 : i32
    %c0_i32_0 = arith.constant 0 : i32
    %c0_i32_1 = arith.constant 0 : i32
    return %c0_i32, %c0_i32_0 : i32, i32
  }
  func.func @transform_5(%arg0: i32, %arg1: i32) -> (i32, i32, i32) {
    %c0_i32 = arith.constant 0 : i32
    %c0_i32_0 = arith.constant 0 : i32
    return %arg0, %c0_i32, %arg1 : i32, i32, i32
  }
}

module attributes {stable_mosaic.version = 11 : i64} {
  func.func @_bottleneck_kernel(%arg0: i32, %arg1: i32, %arg2: memref<1x8x16xf32, #tpu.memory_space<vmem>>, %arg3: memref<128x8xf32, #tpu.memory_space<vmem>>, %arg4: memref<128x1xf32, #tpu.memory_space<vmem>>, %arg5: memref<8x128xf32, #tpu.memory_space<vmem>>, %arg6: memref<8x1xf32, #tpu.memory_space<vmem>>, %arg7: memref<1x8x16xf32, #tpu.memory_space<vmem>>) attributes {dimension_semantics = [#tpu.dimension_semantics<parallel>, #tpu.dimension_semantics<parallel>], iteration_bounds = array<i64: 2, 1>, scalar_prefetch = 0 : i64, scratch_operands = 0 : i64, tpu.core_type = #tpu.core_type<tc>, window_params = [{transform_indices = @transform_0, window_bounds = array<i64: 1, 8, 16>}, {pipeline_mode = #tpu.pipeline_mode<synchronous>, transform_indices = @transform_1, window_bounds = array<i64: 128, 8>}, {pipeline_mode = #tpu.pipeline_mode<synchronous>, transform_indices = @transform_2, window_bounds = array<i64: 128, 1>}, {pipeline_mode = #tpu.pipeline_mode<synchronous>, transform_indices = @transform_3, window_bounds = array<i64: 8, 128>}, {pipeline_mode = #tpu.pipeline_mode<synchronous>, transform_indices = @transform_4, window_bounds = array<i64: 8, 1>}, {transform_indices = @transform_5, window_bounds = array<i64: 1, 8, 16>}]} {
    %c0 = arith.constant 0 : index
    %c0_0 = arith.constant 0 : index
    %c0_1 = arith.constant 0 : index
    %0 = vector.load %arg2[%c0, %c0_0, %c0_1] : memref<1x8x16xf32, #tpu.memory_space<vmem>>, vector<1x8x16xf32>
    %1 = vector.shape_cast %0 : vector<1x8x16xf32> to vector<8x16xf32>
    %c0_2 = arith.constant 0 : index
    %c0_3 = arith.constant 0 : index
    %2 = vector.load %arg3[%c0_2, %c0_3] : memref<128x8xf32, #tpu.memory_space<vmem>>, vector<128x8xf32>
    %cst = arith.constant dense<0.000000e+00> : vector<128x16xf32>
    %3 = tpu.matmul %2, %1, %cst {dimension_numbers = #tpu.dot_dimension_numbers<[1], [0], [0], [1], [0, 0, 1, 1], [], []>} : vector<128x8xf32>, vector<8x16xf32>, vector<128x16xf32> -> vector<128x16xf32>
    %c0_4 = arith.constant 0 : index
    %c0_5 = arith.constant 0 : index
    %4 = vector.load %arg4[%c0_4, %c0_5] : memref<128x1xf32, #tpu.memory_space<vmem>>, vector<128x1xf32>
    %5 = vector.broadcast %4 : vector<128x1xf32> to vector<128x16xf32>
    %6 = arith.addf %3, %5 : vector<128x16xf32>
    %cst_6 = arith.constant 0.000000e+00 : f32
    %7 = vector.broadcast %cst_6 : f32 to vector<128x16xf32>
    %8 = arith.subf %7, %6 : vector<128x16xf32>
    %9 = math.exp %8 : vector<128x16xf32>
    %cst_7 = arith.constant 1.000000e+00 : f32
    %10 = vector.broadcast %cst_7 : f32 to vector<128x16xf32>
    %11 = arith.addf %10, %9 : vector<128x16xf32>
    %cst_8 = arith.constant 1.000000e+00 : f32
    %12 = vector.broadcast %cst_8 : f32 to vector<128x16xf32>
    %13 = arith.divf %12, %11 : vector<128x16xf32>
    %14 = arith.mulf %6, %13 : vector<128x16xf32>
    %c0_9 = arith.constant 0 : index
    %c0_10 = arith.constant 0 : index
    %15 = vector.load %arg5[%c0_9, %c0_10] : memref<8x128xf32, #tpu.memory_space<vmem>>, vector<8x128xf32>
    %cst_11 = arith.constant dense<0.000000e+00> : vector<8x16xf32>
    %16 = tpu.matmul %15, %14, %cst_11 {dimension_numbers = #tpu.dot_dimension_numbers<[1], [0], [0], [1], [0, 0, 1, 1], [], []>} : vector<8x128xf32>, vector<128x16xf32>, vector<8x16xf32> -> vector<8x16xf32>
    %c0_12 = arith.constant 0 : index
    %c0_13 = arith.constant 0 : index
    %17 = vector.load %arg6[%c0_12, %c0_13] : memref<8x1xf32, #tpu.memory_space<vmem>>, vector<8x1xf32>
    %18 = vector.broadcast %17 : vector<8x1xf32> to vector<8x16xf32>
    %19 = arith.addf %16, %18 : vector<8x16xf32>
    %cst_14 = arith.constant 0.000000e+00 : f32
    %20 = vector.broadcast %cst_14 : f32 to vector<8x16xf32>
    %21 = arith.subf %20, %19 : vector<8x16xf32>
    %22 = math.exp %21 : vector<8x16xf32>
    %cst_15 = arith.constant 1.000000e+00 : f32
    %23 = vector.broadcast %cst_15 : f32 to vector<8x16xf32>
    %24 = arith.addf %23, %22 : vector<8x16xf32>
    %cst_16 = arith.constant 1.000000e+00 : f32
    %25 = vector.broadcast %cst_16 : f32 to vector<8x16xf32>
    %26 = arith.divf %25, %24 : vector<8x16xf32>
    %27 = arith.mulf %19, %26 : vector<8x16xf32>
    %28 = arith.addf %27, %1 : vector<8x16xf32>
    %c0_17 = arith.constant 0 : index
    %c0_18 = arith.constant 0 : index
    %c0_19 = arith.constant 0 : index
    %29 = vector.load %arg7[%c0_17, %c0_18, %c0_19] : memref<1x8x16xf32, #tpu.memory_space<vmem>>, vector<1x8x16xf32>
    %30 = vector.shape_cast %29 : vector<1x8x16xf32> to vector<8x16xf32>
    %31 = vector.shape_cast %28 : vector<8x16xf32> to vector<1x8x16xf32>
    tpu.vector_store %arg7[%c0_17, %c0_18, %c0_19], %31 {strides = array<i32>} : memref<1x8x16xf32, #tpu.memory_space<vmem>>, vector<1x8x16xf32>,
    return
  }
  func.func @transform_0(%arg0: i32, %arg1: i32) -> (i32, i32, i32) {
    %c0_i32 = arith.constant 0 : i32
    %c0_i32_0 = arith.constant 0 : i32
    return %arg0, %c0_i32, %arg1 : i32, i32, i32
  }
  func.func @transform_1(%arg0: i32, %arg1: i32) -> (i32, i32) {
    %c0_i32 = arith.constant 0 : i32
    %c0_i32_0 = arith.constant 0 : i32
    %c0_i32_1 = arith.constant 0 : i32
    return %c0_i32, %c0_i32_0 : i32, i32
  }
  func.func @transform_2(%arg0: i32, %arg1: i32) -> (i32, i32) {
    %c0_i32 = arith.constant 0 : i32
    %c0_i32_0 = arith.constant 0 : i32
    %c0_i32_1 = arith.constant 0 : i32
    return %c0_i32, %c0_i32_0 : i32, i32
  }
  func.func @transform_3(%arg0: i32, %arg1: i32) -> (i32, i32) {
    %c0_i32 = arith.constant 0 : i32
    %c0_i32_0 = arith.constant 0 : i32
    %c0_i32_1 = arith.constant 0 : i32
    return %c0_i32, %c0_i32_0 : i32, i32
  }
  func.func @transform_4(%arg0: i32, %arg1: i32) -> (i32, i32) {
    %c0_i32 = arith.constant 0 : i32
    %c0_i32_0 = arith.constant 0 : i32
    %c0_i32_1 = arith.constant 0 : i32
    return %c0_i32, %c0_i32_0 : i32, i32
  }
  func.func @transform_5(%arg0: i32, %arg1: i32) -> (i32, i32, i32) {
    %c0_i32 = arith.constant 0 : i32
    %c0_i32_0 = arith.constant 0 : i32
    return %arg0, %c0_i32, %arg1 : i32, i32, i32
  }
}

</mosaic_0001>

<llo_original>
// kernel: tpu_custom_call.1
$region0: #{tpu_custom_call.1}
  #allocation0 [shape = 'u32[]', space=smem, size = 0x4, offset = 0x4, fixed_abs, tag = 'smem constant byte address 0x4 - core index']
  #allocation1 [shape = 'u32[144,128]{1,0:T(1,128)}', space=vmem, size = 0x12000, scoped, tag = 'internal scratch']
  %s0 = inlined_call_operand.vmem [shape: f32[2,8,16], index: 0, kind: input, shape index: {}]
  %s1 = inlined_call_operand.vmem [shape: f32[128,8], index: 1, kind: input, shape index: {}]
  %s2 = inlined_call_operand.vmem [shape: f32[128,1], index: 2, kind: input, shape index: {}]
  %s3 = inlined_call_operand.vmem [shape: f32[8,128], index: 3, kind: input, shape index: {}]
  %s4 = inlined_call_operand.vmem [shape: f32[8,1], index: 4, kind: input, shape index: {}]
  %s5 = inlined_call_operand.hbm [shape: f32[2,8,16], index: 5, kind: output, shape index: {}]
  %s6 = sld [smem:[#allocation0]]
  $region53: #{tpu_custom_call.1} parent=0
    _
  %s8 = ssub.s32 1, %s6
  %s9 = scalar_select 0, %s8, %s6
  $region1: #{tpu_custom_call.1} parent=0
    #allocation2 [shape = 'u8[8192]{0}', space=vmem, size = 0x2000, scoped, tag = 'output window, operand 0']
    #allocation3 [shape = 's32[2]{0}', space=sflag, size = 0x8, scoped, tag = 'scoped memory for tpu_custom_call.1']
    %10 = vsyncpa [#allocation3], 0
    %s11 = scalar_lea.sflag [#allocation3], 1
    %12 = vsyncpa %s11, 0
    loop: start=0, step=1, limit=4
    $region2: #{tpu_custom_call.1} parent=1 // loop_pre_header
      _
    $region3: #{tpu_custom_call.1} parent=1 // loop_header
      %s14 = sphi 0, %s18
      %p15 = scmp.ge.s32.totalorder %s14, 4
      %s21 = sphi 0, %s33
      %s22 = sphi 0, %s29
      %s23 = sphi 0, %s21
      %s24 = sphi 0, %s22
      %s25 = sphi 0, %s23
      %s26 = sphi 0, %s24
      %s38 = sphi 0, %s40
      %s41 = sphi 0, %s38
      %s42 = sphi 0, %s41
      %s58 = sphi 0, %s42
      %s62 = sphi 0, %s62
      %s64 = sphi 0, %s62
      %s65 = sphi 0, %s64
      %s79 = sphi 0, %s65
      %s83 = sphi 0, %s83
      %s85 = sphi 0, %s83
      %s86 = sphi 0, %s85
      %s100 = sphi 0, %s86
      %s104 = sphi 0, %s104
      %s106 = sphi 0, %s104
      %s107 = sphi 0, %s106
      %s121 = sphi 0, %s107
      %s125 = sphi 0, %s125
      %s127 = sphi 0, %s125
      %s128 = sphi 0, %s127
      %s142 = sphi 0, %s128
      %s150 = sphi 0, %s152
      %s153 = sphi 0, %s150
      %s154 = sphi 0, %s153
      %s170 = sphi 0, %s154
    $region4: #{tpu_custom_call.1} parent=1 // loop_header_branch
      %17 = sbr.rel (%p15) target = $region8
    $region5: #{tpu_custom_call.1} parent=1 // loop_body
      %s19 = ssub.s32 %s14, 1
      %s20 = ssub.s32 %s14, 2
      %s27 = sadd.s32 1, %s22
      %p28 = scmp.ge.s32.totalorder %s27, 1
      %s29 = scalar_select %p28, 0, %s27
      %s30 = sadd.s32 1, %s21
      %s31 = scalar_select %p28, %s30, %s21
      %p32 = scmp.ge.s32.totalorder %s31, 2
      %s33 = scalar_select %p32, 0, %s31
      %s34 = ssub.s32 %s21, %s33
      %s35 = ssub.s32 %s22, %s29
      %s36 = sor.u32 %s34, %s35
      %p37 = scmp.eq.s32.totalorder %s36, 0
      %s39 = sadd.s32 %s38, 1
      %s40 = scalar_select %p37, %s38, %s39
      %p43 = pneg %p37
      %p44 = scmp.eq.s32.totalorder %s14, 1
      %p45 = por %p43, %p44
      %p46 = scmp.ne.s32.totalorder %s38, %s41
      %p47 = scmp.eq.s32.totalorder %s14, 0
      %p48 = por %p46, %p47
      %p49 = scmp.ne.s32.totalorder %s38, %s41
      %p50 = scmp.eq.s32.totalorder %s19, 1
      %p51 = por %p49, %p50
      %p52 = scmp.ne.s32.totalorder %s41, %s42
      %p53 = scmp.eq.s32.totalorder %s19, 0
      %p54 = por %p52, %p53
      %p55 = scmp.ne.s32.totalorder %s41, %s42
      %p56 = scmp.eq.s32.totalorder %s20, 1
      %p57 = por %p55, %p56
      %p59 = scmp.ne.s32.totalorder %s42, %s58
      %p60 = scmp.eq.s32.totalorder %s20, 0
      %p61 = por %p59, %p60
      %s63 = sadd.s32 %s62, 1
      %p66 = scmp.eq.s32.totalorder %s14, 1
      %p67 = scmp.ne.s32.totalorder %s62, %s64
      %p68 = scmp.eq.s32.totalorder %s14, 0
      %p69 = por %p67, %p68
      %p70 = scmp.ne.s32.totalorder %s62, %s64
      %p71 = scmp.eq.s32.totalorder %s19, 1
      %p72 = por %p70, %p71
      %p73 = scmp.ne.s32.totalorder %s64, %s65
      %p74 = scmp.eq.s32.totalorder %s19, 0
      %p75 = por %p73, %p74
      %p76 = scmp.ne.s32.totalorder %s64, %s65
      %p77 = scmp.eq.s32.totalorder %s20, 1
      %p78 = por %p76, %p77
      %p80 = scmp.ne.s32.totalorder %s65, %s79
      %p81 = scmp.eq.s32.totalorder %s20, 0
      %p82 = por %p80, %p81
      %s84 = sadd.s32 %s83, 1
      %p87 = scmp.eq.s32.totalorder %s14, 1
      %p88 = scmp.ne.s32.totalorder %s83, %s85
      %p89 = scmp.eq.s32.totalorder %s14, 0
      %p90 = por %p88, %p89
      %p91 = scmp.ne.s32.totalorder %s83, %s85
      %p92 = scmp.eq.s32.totalorder %s19, 1
      %p93 = por %p91, %p92
      %p94 = scmp.ne.s32.totalorder %s85, %s86
      %p95 = scmp.eq.s32.totalorder %s19, 0
      %p96 = por %p94, %p95
      %p97 = scmp.ne.s32.totalorder %s85, %s86
      %p98 = scmp.eq.s32.totalorder %s20, 1
      %p99 = por %p97, %p98
      %p101 = scmp.ne.s32.totalorder %s86, %s100
      %p102 = scmp.eq.s32.totalorder %s20, 0
      %p103 = por %p101, %p102
      %s105 = sadd.s32 %s104, 1
      %p108 = scmp.eq.s32.totalorder %s14, 1
      %p109 = scmp.ne.s32.totalorder %s104, %s106
      %p110 = scmp.eq.s32.totalorder %s14, 0
      %p111 = por %p109, %p110
      %p112 = scmp.ne.s32.totalorder %s104, %s106
      %p113 = scmp.eq.s32.totalorder %s19, 1
      %p114 = por %p112, %p113
      %p115 = scmp.ne.s32.totalorder %s106, %s107
      %p116 = scmp.eq.s32.totalorder %s19, 0
      %p117 = por %p115, %p116
      %p118 = scmp.ne.s32.totalorder %s106, %s107
      %p119 = scmp.eq.s32.totalorder %s20, 1
      %p120 = por %p118, %p119
      %p122 = scmp.ne.s32.totalorder %s107, %s121
      %p123 = scmp.eq.s32.totalorder %s20, 0
      %p124 = por %p122, %p123
      %s126 = sadd.s32 %s125, 1
      %p129 = scmp.eq.s32.totalorder %s14, 1
      %p130 = scmp.ne.s32.totalorder %s125, %s127
      %p131 = scmp.eq.s32.totalorder %s14, 0
      %p132 = por %p130, %p131
      %p133 = scmp.ne.s32.totalorder %s125, %s127
      %p134 = scmp.eq.s32.totalorder %s19, 1
      %p135 = por %p133, %p134
      %p136 = scmp.ne.s32.totalorder %s127, %s128
      %p137 = scmp.eq.s32.totalorder %s19, 0
      %p138 = por %p136, %p137
      %p139 = scmp.ne.s32.totalorder %s127, %s128
      %p140 = scmp.eq.s32.totalorder %s20, 1
      %p141 = por %p139, %p140
      %p143 = scmp.ne.s32.totalorder %s128, %s142
      %p144 = scmp.eq.s32.totalorder %s20, 0
      %p145 = por %p143, %p144
      %s146 = ssub.s32 %s21, %s33
      %s147 = ssub.s32 %s22, %s29
      %s148 = sor.u32 %s146, %s147
      %p149 = scmp.eq.s32.totalorder %s148, 0
      %s151 = sadd.s32 %s150, 1
      %s152 = scalar_select %p149, %s150, %s151
      %p155 = pneg %p149
      %p156 = scmp.eq.s32.totalorder %s14, 1
      %p157 = por %p155, %p156
      %p158 = scmp.ne.s32.totalorder %s150, %s153
      %p159 = scmp.eq.s32.totalorder %s14, 0
      %p160 = por %p158, %p159
      %p161 = scmp.ne.s32.totalorder %s150, %s153
      %p162 = scmp.eq.s32.totalorder %s19, 1
      %p163 = por %p161, %p162
      %p164 = scmp.ne.s32.totalorder %s153, %s154
      %p165 = scmp.eq.s32.totalorder %s19, 0
      %p166 = por %p164, %p165
      %p167 = scmp.ne.s32.totalorder %s153, %s154
      %p168 = scmp.eq.s32.totalorder %s20, 1
      %p169 = por %p167, %p168
      %p171 = scmp.ne.s32.totalorder %s154, %s170
      %p172 = scmp.eq.s32.totalorder %s20, 0
      %p173 = por %p171, %p172
      %p174 = scmp.le.s32.totalorder 1, %s14
      %p175 = scmp.lt.s32.totalorder %s14, 3
      %p176 = pnand %p174, %p175
      %p177 = pneg %p176
      // Predicated region
      $region9: #{tpu_custom_call.1} parent=5 // pred_check
        _
      $region10: #{tpu_custom_call.1} parent=5 // pred_check_branch
        %179 = sbr.rel (%p176) target = $region12
      $region11: #{tpu_custom_call.1} parent=5 // pred_region
        %s180 = ssub.s32 %s14, 1
        // Predicated region
        $region13: #{tpu_custom_call.1} parent=11 // pred_check
          %p181 = pneg %p75
        $region14: #{tpu_custom_call.1} parent=11 // pred_check_branch
          %183 = sbr.rel (%p181) target = $region16
        $region15: #{tpu_custom_call.1} parent=11 // pred_region
          _
        $region16: #{tpu_custom_call.1} parent=11 // pred_fallthru
          _
        // Predicated region
        $region17: #{tpu_custom_call.1} parent=11 // pred_check
          %p184 = pneg %p96
        $region18: #{tpu_custom_call.1} parent=11 // pred_check_branch
          %186 = sbr.rel (%p184) target = $region20
        $region19: #{tpu_custom_call.1} parent=11 // pred_region
          _
        $region20: #{tpu_custom_call.1} parent=11 // pred_fallthru
          _
        // Predicated region
        $region21: #{tpu_custom_call.1} parent=11 // pred_check
          %p187 = pneg %p117
        $region22: #{tpu_custom_call.1} parent=11 // pred_check_branch
          %189 = sbr.rel (%p187) target = $region24
        $region23: #{tpu_custom_call.1} parent=11 // pred_region
          _
        $region24: #{tpu_custom_call.1} parent=11 // pred_fallthru
          _
        // Predicated region
        $region25: #{tpu_custom_call.1} parent=11 // pred_check
          %p190 = pneg %p138
        $region26: #{tpu_custom_call.1} parent=11 // pred_check_branch
          %192 = sbr.rel (%p190) target = $region28
        $region27: #{tpu_custom_call.1} parent=11 // pred_region
          _
        $region28: #{tpu_custom_call.1} parent=11 // pred_fallthru
          _
      $region12: #{tpu_custom_call.1} parent=5 // pred_fallthru
        _
      %p193 = scmp.lt.s32.totalorder %s14, 2
      // Predicated region
      $region29: #{tpu_custom_call.1} parent=5 // pred_check
        %p194 = pneg %p193
      $region30: #{tpu_custom_call.1} parent=5 // pred_check_branch
        %196 = sbr.rel (%p194) target = $region32
      $region31: #{tpu_custom_call.1} parent=5 // pred_region
        // Predicated region
        $region33: #{tpu_custom_call.1} parent=31 // pred_check
          %p197 = pneg %p48
        $region34: #{tpu_custom_call.1} parent=31 // pred_check_branch
          %199 = sbr.rel (%p197) target = $region36
        $region35: #{tpu_custom_call.1} parent=31 // pred_region
          %p200 = scmp.lt.s32.totalorder %s21, 1
          %s201 = scalar_select %p200, %s21, 1
          %p202 = scmp.lt.s32.totalorder %s22, 0
          %s203 = scalar_select %p202, %s22, 0
          %s204 = sadd.s32 %s203, %s201
          %s205 = smul.addr %s204, 8
          %s206 = scalar_lea.vmem %s0, %s205
        $region36: #{tpu_custom_call.1} parent=31 // pred_fallthru
          _
      $region32: #{tpu_custom_call.1} parent=5 // pred_fallthru
        _
      %p207 = scmp.le.s32.totalorder 1, %s14
      %p208 = scmp.lt.s32.totalorder %s14, 3
      %p209 = pnand %p207, %p208
      %p210 = pneg %p209
      // Predicated region
      $region37: #{tpu_custom_call.1} parent=5 // pred_check
        _
      $region38: #{tpu_custom_call.1} parent=5 // pred_check_branch
        %212 = sbr.rel (%p209) target = $region40
      $region39: #{tpu_custom_call.1} parent=5 // pred_region
        %s213 = ssub.s32 %s14, 1
        %p214 = scmp.lt.s32.totalorder %s23, 1
        %s215 = scalar_select %p214, %s23, 1
        %p216 = scmp.lt.s32.totalorder %s24, 0
        %s217 = scalar_select %p216, %s24, 0
        %s218 = sadd.s32 %s217, %s215
        %s219 = smul.addr %s218, 8
        %s220 = scalar_lea.vmem %s0, %s219
        %p221 = pneg %p54
        %p222 = pneg %p51
        %p223 = pneg %p75
        %p224 = pneg %p72
        %p225 = pneg %p96
        %p226 = pneg %p93
        %p227 = pneg %p117
        %p228 = pneg %p114
        %p229 = pneg %p138
        %p230 = pneg %p135
        %p231 = pneg %p166
        %p232 = pneg %p163
        %s233 = sand.u32 %s153, 1
        %s234 = scalar_lea.sflag [#allocation3], %s233
        %s235 = sand.u32 %s153, 1
        %s236 = smul.addr %s235, 8
        %s237 = scalar_lea.vmem [#allocation2], %s236
        %p238 = scmp.lt.s32.totalorder %s23, 1
        %s239 = scalar_select %p238, %s23, 1
        %p240 = scmp.lt.s32.totalorder %s24, 0
        %s241 = scalar_select %p240, %s24, 0
        %s242 = sadd.s32 %s241, %s239
        %s243 = smul.addr %s242, 8
        %s244 = scalar_lea.vmem %s0, %s243
        %v245 = vld [vmem:[%s244] sm:$0xff]
        %v246 = vld [vmem:[%s1] sm:$0xff]
        %v247 = vld [vmem:[%s1 + $0x8] sm:$0xff]
        %v248 = vld [vmem:[%s1 + $0x10] sm:$0xff]
        %v249 = vld [vmem:[%s1 + $0x18] sm:$0xff]
        %v250 = vld [vmem:[%s1 + $0x20] sm:$0xff]
        %v251 = vld [vmem:[%s1 + $0x28] sm:$0xff]
        %v252 = vld [vmem:[%s1 + $0x30] sm:$0xff]
        %v253 = vld [vmem:[%s1 + $0x38] sm:$0xff]
        %v254 = vld [vmem:[%s1 + $0x40] sm:$0xff]
        %v255 = vld [vmem:[%s1 + $0x48] sm:$0xff]
        %v256 = vld [vmem:[%s1 + $0x50] sm:$0xff]
        %v257 = vld [vmem:[%s1 + $0x58] sm:$0xff]
        %v258 = vld [vmem:[%s1 + $0x60] sm:$0xff]
        %v259 = vld [vmem:[%s1 + $0x68] sm:$0xff]
        %v260 = vld [vmem:[%s1 + $0x70] sm:$0xff]
        %v261 = vld [vmem:[%s1 + $0x78] sm:$0xff]
        %v262 = vld [vmem:[%s2] sm:$0xff]
        %v263 = vld [vmem:[%s2 + $0x8] sm:$0xff]
        %v264 = vld [vmem:[%s2 + $0x10] sm:$0xff]
        %v265 = vld [vmem:[%s2 + $0x18] sm:$0xff]
        %v266 = vld [vmem:[%s2 + $0x20] sm:$0xff]
        %v267 = vld [vmem:[%s2 + $0x28] sm:$0xff]
        %v268 = vld [vmem:[%s2 + $0x30] sm:$0xff]
        %v269 = vld [vmem:[%s2 + $0x38] sm:$0xff]
        %v270 = vld [vmem:[%s2 + $0x40] sm:$0xff]
        %v271 = vld [vmem:[%s2 + $0x48] sm:$0xff]
        %v272 = vld [vmem:[%s2 + $0x50] sm:$0xff]
        %v273 = vld [vmem:[%s2 + $0x58] sm:$0xff]
        %v274 = vld [vmem:[%s2 + $0x60] sm:$0xff]
        %v275 = vld [vmem:[%s2 + $0x68] sm:$0xff]
        %v276 = vld [vmem:[%s2 + $0x70] sm:$0xff]
        %v277 = vld [vmem:[%s2 + $0x78] sm:$0xff]
        %279 = vset.pattern.permute.xlu0 0
        %280 = vperm.xlu0 %279, %v262
        %v281 = vpop.permute.xlu0 %280
        %284 = vset.pattern.permute.xlu0 0
        %285 = vperm.xlu0 %284, %v263
        %v286 = vpop.permute.xlu0 %285
        %289 = vset.pattern.permute.xlu0 0
        %290 = vperm.xlu0 %289, %v264
        %v291 = vpop.permute.xlu0 %290
        %294 = vset.pattern.permute.xlu0 0
        %295 = vperm.xlu0 %294, %v265
        %v296 = vpop.permute.xlu0 %295
        %299 = vset.pattern.permute.xlu0 0
        %300 = vperm.xlu0 %299, %v266
        %v301 = vpop.permute.xlu0 %300
        %304 = vset.pattern.permute.xlu0 0
        %305 = vperm.xlu0 %304, %v267
        %v306 = vpop.permute.xlu0 %305
        %309 = vset.pattern.permute.xlu0 0
        %310 = vperm.xlu0 %309, %v268
        %v311 = vpop.permute.xlu0 %310
        %314 = vset.pattern.permute.xlu0 0
        %315 = vperm.xlu0 %314, %v269
        %v316 = vpop.permute.xlu0 %315
        %319 = vset.pattern.permute.xlu0 0
        %320 = vperm.xlu0 %319, %v270
        %v321 = vpop.permute.xlu0 %320
        %324 = vset.pattern.permute.xlu0 0
        %325 = vperm.xlu0 %324, %v271
        %v326 = vpop.permute.xlu0 %325
        %329 = vset.pattern.permute.xlu0 0
        %330 = vperm.xlu0 %329, %v272
        %v331 = vpop.permute.xlu0 %330
        %334 = vset.pattern.permute.xlu0 0
        %335 = vperm.xlu0 %334, %v273
        %v336 = vpop.permute.xlu0 %335
        %339 = vset.pattern.permute.xlu0 0
        %340 = vperm.xlu0 %339, %v274
        %v341 = vpop.permute.xlu0 %340
        %344 = vset.pattern.permute.xlu0 0
        %345 = vperm.xlu0 %344, %v275
        %v346 = vpop.permute.xlu0 %345
        %349 = vset.pattern.permute.xlu0 0
        %350 = vperm.xlu0 %349, %v276
        %v351 = vpop.permute.xlu0 %350
        %354 = vset.pattern.permute.xlu0 0
        %355 = vperm.xlu0 %354, %v277
        %v356 = vpop.permute.xlu0 %355
        %vm358 = vcmask 64512
        %v360 = vsel %vm358, %v246, 0
        %v363 = vsel %vm358, %v247, 0
        %v366 = vsel %vm358, %v248, 0
        %v369 = vsel %vm358, %v249, 0
        %v372 = vsel %vm358, %v250, 0
        %v375 = vsel %vm358, %v251, 0
        %v378 = vsel %vm358, %v252, 0
        %v381 = vsel %vm358, %v253, 0
        %v384 = vsel %vm358, %v254, 0
        %v387 = vsel %vm358, %v255, 0
        %v390 = vsel %vm358, %v256, 0
        %v393 = vsel %vm358, %v257, 0
        %v396 = vsel %vm358, %v258, 0
        %v399 = vsel %vm358, %v259, 0
        %v402 = vsel %vm358, %v260, 0
        %v405 = vsel %vm358, %v261, 0
        %407 = vmatprep.subr.mxu0 0.0
        %408 = vmatpush1.msra.mxu0 %v245
        %409 = vmatprep.subr.mxu0 0.0
        %410 = vmatpush1.msra.mxu0 0.0
        %411 = vmatprep.subr.mxu0 0.0
        %412 = vmatpush1.msra.mxu0 0.0
        %413 = vmatprep.subr.mxu0 0.0
        %414 = vmatpush1.msra.mxu0 0.0
        %415 = vmatprep.subr.mxu0 0.0
        %416 = vmatpush1.msra.mxu0 0.0
        %417 = vmatprep.subr.mxu0 0.0
        %418 = vmatpush1.msra.mxu0 0.0
        %419 = vmatprep.subr.mxu0 0.0
        %420 = vmatpush1.msra.mxu0 0.0
        %421 = vmatprep.subr.mxu0 0.0
        %422 = vmatpush1.msra.mxu0 0.0
        %423 = vmatprep.subr.mxu0 0.0
        %424 = vmatpush1.msra.mxu0 0.0
        %425 = vmatprep.subr.mxu0 0.0
        %426 = vmatpush1.msra.mxu0 0.0
        %427 = vmatprep.subr.mxu0 0.0
        %428 = vmatpush1.msra.mxu0 0.0
        %429 = vmatprep.subr.mxu0 0.0
        %430 = vmatpush1.msra.mxu0 0.0
        %431 = vmatprep.subr.mxu0 0.0
        %432 = vmatpush1.msra.mxu0 0.0
        %433 = vmatprep.subr.mxu0 0.0
        %434 = vmatpush1.msra.mxu0 0.0
        %435 = vmatprep.subr.mxu0 0.0
        %436 = vmatpush1.msra.mxu0 0.0
        %437 = vmatprep.subr.mxu0 0.0
        %438 = vmatpush1.msra.mxu0 0.0
        %439 = vmatprep.subr.mxu0 0.0
        %440 = vmatpush1.msra.mxu0 0.0
        %441 = vmatprep.subr.mxu0 0.0
        %442 = vmatpush1.msra.mxu0 0.0
        %443 = vmatprep.subr.mxu0 0.0
        %444 = vmatpush1.msra.mxu0 0.0
        %445 = vmatprep.subr.mxu0 0.0
        %446 = vmatpush1.msra.mxu0 0.0
        %447 = vmatprep.subr.mxu0 0.0
        %448 = vmatpush1.msra.mxu0 0.0
        %449 = vmatprep.subr.mxu0 0.0
        %450 = vmatpush1.msra.mxu0 0.0
        %451 = vmatprep.subr.mxu0 0.0
        %452 = vmatpush1.msra.mxu0 0.0
        %453 = vmatprep.subr.mxu0 0.0
        %454 = vmatpush1.msra.mxu0 0.0
        %455 = vmatprep.subr.mxu0 0.0
        %456 = vmatpush1.msra.mxu0 0.0
        %457 = vmatprep.subr.mxu0 0.0
        %458 = vmatpush1.msra.mxu0 0.0
        %459 = vmatprep.subr.mxu0 0.0
        %460 = vmatpush1.msra.mxu0 0.0
        %461 = vmatprep.subr.mxu0 0.0
        %462 = vmatpush1.msra.mxu0 0.0
        %463 = vmatprep.subr.mxu0 0.0
        %464 = vmatpush1.msra.mxu0 0.0
        %465 = vmatprep.subr.mxu0 0.0
        %466 = vmatpush1.msra.mxu0 0.0
        %467 = vmatprep.subr.mxu0 0.0
        %468 = vmatpush1.msra.mxu0 0.0
        %469 = vmatprep.subr.mxu0 0.0
        %470 = vmatpush1.msra.mxu0 0.0
        %471 = vmatprep.mubr.f32.mxu0 0.0
        %472 = vmatmul.mubr.f32.gmra.mrb[0].mxu0 %v360
        %v473 = vpop.f32.mrb[0].mxu0
        %v474 = vadd.f32 %v281, %v473
        %v475 = vpop.f32.mrb[0].mxu0
        %476 = vmatprep.mubr.f32.mxu0 0.0
        %477 = vmatmul.mubr.f32.gmra.mrb[0].mxu0 %v363
        %v478 = vpop.f32.mrb[0].mxu0
        %v479 = vadd.f32 %v286, %v478
        %v480 = vpop.f32.mrb[0].mxu0
        %481 = vmatprep.mubr.f32.mxu0 0.0
        %482 = vmatmul.mubr.f32.gmra.mrb[0].mxu0 %v366
        %v483 = vpop.f32.mrb[0].mxu0
        %v484 = vadd.f32 %v291, %v483
        %v485 = vpop.f32.mrb[0].mxu0
        %486 = vmatprep.mubr.f32.mxu0 0.0
        %487 = vmatmul.mubr.f32.gmra.mrb[0].mxu0 %v369
        %v488 = vpop.f32.mrb[0].mxu0
        %v489 = vadd.f32 %v296, %v488
        %v490 = vpop.f32.mrb[0].mxu0
        %491 = vmatprep.mubr.f32.mxu0 0.0
        %492 = vmatmul.mubr.f32.gmra.mrb[0].mxu0 %v372
        %v493 = vpop.f32.mrb[0].mxu0
        %v494 = vadd.f32 %v301, %v493
        %v495 = vpop.f32.mrb[0].mxu0
        %496 = vmatprep.mubr.f32.mxu0 0.0
        %497 = vmatmul.mubr.f32.gmra.mrb[0].mxu0 %v375
        %v498 = vpop.f32.mrb[0].mxu0
        %v499 = vadd.f32 %v306, %v498
        %v500 = vpop.f32.mrb[0].mxu0
        %501 = vmatprep.mubr.f32.mxu0 0.0
        %502 = vmatmul.mubr.f32.gmra.mrb[0].mxu0 %v378
        %v503 = vpop.f32.mrb[0].mxu0
        %v504 = vadd.f32 %v311, %v503
        %v505 = vpop.f32.mrb[0].mxu0
        %506 = vmatprep.mubr.f32.mxu0 0.0
        %507 = vmatmul.mubr.f32.gmra.mrb[0].mxu0 %v381
        %v508 = vpop.f32.mrb[0].mxu0
        %v509 = vadd.f32 %v316, %v508
        %v510 = vpop.f32.mrb[0].mxu0
        %511 = vmatprep.mubr.f32.mxu0 0.0
        %512 = vmatmul.mubr.f32.gmra.mrb[0].mxu0 %v384
        %v513 = vpop.f32.mrb[0].mxu0
        %v514 = vadd.f32 %v321, %v513
        %v515 = vpop.f32.mrb[0].mxu0
        %516 = vmatprep.mubr.f32.mxu0 0.0
        %517 = vmatmul.mubr.f32.gmra.mrb[0].mxu0 %v387
        %v518 = vpop.f32.mrb[0].mxu0
        %v519 = vadd.f32 %v326, %v518
        %v520 = vpop.f32.mrb[0].mxu0
        %521 = vmatprep.mubr.f32.mxu0 0.0
        %522 = vmatmul.mubr.f32.gmra.mrb[0].mxu0 %v390
        %v523 = vpop.f32.mrb[0].mxu0
        %v524 = vadd.f32 %v331, %v523
        %v525 = vpop.f32.mrb[0].mxu0
        %526 = vmatprep.mubr.f32.mxu0 0.0
        %527 = vmatmul.mubr.f32.gmra.mrb[0].mxu0 %v393
        %v528 = vpop.f32.mrb[0].mxu0
        %v529 = vadd.f32 %v336, %v528
        %v530 = vpop.f32.mrb[0].mxu0
        %531 = vmatprep.mubr.f32.mxu0 0.0
        %532 = vmatmul.mubr.f32.gmra.mrb[0].mxu0 %v396
        %v533 = vpop.f32.mrb[0].mxu0
        %v534 = vadd.f32 %v341, %v533
        %v535 = vpop.f32.mrb[0].mxu0
        %536 = vmatprep.mubr.f32.mxu0 0.0
        %537 = vmatmul.mubr.f32.gmra.mrb[0].mxu0 %v399
        %v538 = vpop.f32.mrb[0].mxu0
        %v539 = vadd.f32 %v346, %v538
        %v540 = vpop.f32.mrb[0].mxu0
        %541 = vmatprep.mubr.f32.mxu0 0.0
        %542 = vmatmul.mubr.f32.gmra.mrb[0].mxu0 %v402
        %v543 = vpop.f32.mrb[0].mxu0
        %v544 = vadd.f32 %v351, %v543
        %v545 = vpop.f32.mrb[0].mxu0
        %546 = vmatprep.mubr.f32.mxu0 0.0
        %547 = vmatmul.mubr.f32.gmra.mrb[0].mxu0 %v405
        %v548 = vpop.f32.mrb[0].mxu0
        %v549 = vadd.f32 %v356, %v548
        %v550 = vpop.f32.mrb[0].mxu0
        %551 = vdwg.mxu0
        %v552 = vsub.f32 0.0, %v474
        %v553 = vsub.f32 0.0, %v479
        %v554 = vsub.f32 0.0, %v484
        %v555 = vsub.f32 0.0, %v489
        %v556 = vsub.f32 0.0, %v494
        %v557 = vsub.f32 0.0, %v499
        %v558 = vsub.f32 0.0, %v504
        %v559 = vsub.f32 0.0, %v509
        %v560 = vsub.f32 0.0, %v514
        %v561 = vsub.f32 0.0, %v519
        %v562 = vsub.f32 0.0, %v524
        %v563 = vsub.f32 0.0, %v529
        %v564 = vsub.f32 0.0, %v534
        %v565 = vsub.f32 0.0, %v539
        %v566 = vsub.f32 0.0, %v544
        %v567 = vsub.f32 0.0, %v549
        %v568 = vmul.f32 %v552, 1.442695
        %v569 = vpow.pop %v568
        %v570 = vmul.f32 %v553, 1.442695
        %v571 = vpow.pop %v570
        %v572 = vmul.f32 %v554, 1.442695
        %v573 = vpow.pop %v572
        %v574 = vmul.f32 %v555, 1.442695
        %v575 = vpow.pop %v574
        %v576 = vmul.f32 %v556, 1.442695
        %v577 = vpow.pop %v576
        %v578 = vmul.f32 %v557, 1.442695
        %v579 = vpow.pop %v578
        %v580 = vmul.f32 %v558, 1.442695
        %v581 = vpow.pop %v580
        %v582 = vmul.f32 %v559, 1.442695
        %v583 = vpow.pop %v582
        %v584 = vmul.f32 %v560, 1.442695
        %v585 = vpow.pop %v584
        %v586 = vmul.f32 %v561, 1.442695
        %v587 = vpow.pop %v586
        %v588 = vmul.f32 %v562, 1.442695
        %v589 = vpow.pop %v588
        %v590 = vmul.f32 %v563, 1.442695
        %v591 = vpow.pop %v590
        %v592 = vmul.f32 %v564, 1.442695
        %v593 = vpow.pop %v592
        %v594 = vmul.f32 %v565, 1.442695
        %v595 = vpow.pop %v594
        %v596 = vmul.f32 %v566, 1.442695
        %v597 = vpow.pop %v596
        %v598 = vmul.f32 %v567, 1.442695
        %v599 = vpow.pop %v598
        %v600 = vadd.f32 %v569, 1.0
        %v601 = vadd.f32 %v571, 1.0
        %v602 = vadd.f32 %v573, 1.0
        %v603 = vadd.f32 %v575, 1.0
        %v604 = vadd.f32 %v577, 1.0
        %v605 = vadd.f32 %v579, 1.0
        %v606 = vadd.f32 %v581, 1.0
        %v607 = vadd.f32 %v583, 1.0
        %v608 = vadd.f32 %v585, 1.0
        %v609 = vadd.f32 %v587, 1.0
        %v610 = vadd.f32 %v589, 1.0
        %v611 = vadd.f32 %v591, 1.0
        %v612 = vadd.f32 %v593, 1.0
        %v613 = vadd.f32 %v595, 1.0
        %v614 = vadd.f32 %v597, 1.0
        %v615 = vadd.f32 %v599, 1.0
        %v616 = vrcp.pop %v600
        %v617 = vmul.f32 1.0, %v616
        %v618 = vrcp.pop %v601
        %v619 = vmul.f32 1.0, %v618
        %v620 = vrcp.pop %v602
        %v621 = vmul.f32 1.0, %v620
        %v622 = vrcp.pop %v603
        %v623 = vmul.f32 1.0, %v622
        %v624 = vrcp.pop %v604
        %v625 = vmul.f32 1.0, %v624
        %v626 = vrcp.pop %v605
        %v627 = vmul.f32 1.0, %v626
        %v628 = vrcp.pop %v606
        %v629 = vmul.f32 1.0, %v628
        %v630 = vrcp.pop %v607
        %v631 = vmul.f32 1.0, %v630
        %v632 = vrcp.pop %v608
        %v633 = vmul.f32 1.0, %v632
        %v634 = vrcp.pop %v609
        %v635 = vmul.f32 1.0, %v634
        %v636 = vrcp.pop %v610
        %v637 = vmul.f32 1.0, %v636
        %v638 = vrcp.pop %v611
        %v639 = vmul.f32 1.0, %v638
        %v640 = vrcp.pop %v612
        %v641 = vmul.f32 1.0, %v640
        %v642 = vrcp.pop %v613
        %v643 = vmul.f32 1.0, %v642
        %v644 = vrcp.pop %v614
        %v645 = vmul.f32 1.0, %v644
        %v646 = vrcp.pop %v615
        %v647 = vmul.f32 1.0, %v646
        %v648 = vmul.f32 %v474, %v617
        %v649 = vmul.f32 %v479, %v619
        %v650 = vmul.f32 %v484, %v621
        %v651 = vmul.f32 %v489, %v623
        %v652 = vmul.f32 %v494, %v625
        %v653 = vmul.f32 %v499, %v627
        %v654 = vmul.f32 %v504, %v629
        %v655 = vmul.f32 %v509, %v631
        %v656 = vmul.f32 %v514, %v633
        %v657 = vmul.f32 %v519, %v635
        %v658 = vmul.f32 %v524, %v637
        %v659 = vmul.f32 %v529, %v639
        %v660 = vmul.f32 %v534, %v641
        %v661 = vmul.f32 %v539, %v643
        %v662 = vmul.f32 %v544, %v645
        %v663 = vmul.f32 %v549, %v647
        %v664 = vld [vmem:[%s3] sm:$0xff]
        %v665 = vld [vmem:[%s4] sm:$0xff]
        %667 = vset.pattern.permute.xlu0 0
        %668 = vperm.xlu0 %667, %v665
        %v669 = vpop.permute.xlu0 %668
        %671 = vmatprep.subr.mxu0 0.0
        %672 = vmatpush1.msra.mxu0 %v648
        %673 = vmatprep.subr.mxu0 0.0
        %674 = vmatpush1.msra.mxu0 %v649
        %675 = vmatprep.subr.mxu0 0.0
        %676 = vmatpush1.msra.mxu0 %v650
        %677 = vmatprep.subr.mxu0 0.0
        %678 = vmatpush1.msra.mxu0 %v651
        %679 = vmatprep.subr.mxu0 0.0
        %680 = vmatpush1.msra.mxu0 %v652
        %681 = vmatprep.subr.mxu0 0.0
        %682 = vmatpush1.msra.mxu0 %v653
        %683 = vmatprep.subr.mxu0 0.0
        %684 = vmatpush1.msra.mxu0 %v654
        %685 = vmatprep.subr.mxu0 0.0
        %686 = vmatpush1.msra.mxu0 %v655
        %687 = vmatprep.subr.mxu0 0.0
        %688 = vmatpush1.msra.mxu0 %v656
        %689 = vmatprep.subr.mxu0 0.0
        %690 = vmatpush1.msra.mxu0 %v657
        %691 = vmatprep.subr.mxu0 0.0
        %692 = vmatpush1.msra.mxu0 %v658
        %693 = vmatprep.subr.mxu0 0.0
        %694 = vmatpush1.msra.mxu0 %v659
        %695 = vmatprep.subr.mxu0 0.0
        %696 = vmatpush1.msra.mxu0 %v660
        %697 = vmatprep.subr.mxu0 0.0
        %698 = vmatpush1.msra.mxu0 %v661
        %699 = vmatprep.subr.mxu0 0.0
        %700 = vmatpush1.msra.mxu0 %v662
        %701 = vmatprep.subr.mxu0 0.0
        %702 = vmatpush1.msra.mxu0 %v663
        %703 = vmatprep.subr.mxu0 0.0
        %704 = vmatpush1.msra.mxu0 0.0
        %705 = vmatprep.subr.mxu0 0.0
        %706 = vmatpush1.msra.mxu0 0.0
        %707 = vmatprep.subr.mxu0 0.0
        %708 = vmatpush1.msra.mxu0 0.0
        %709 = vmatprep.subr.mxu0 0.0
        %710 = vmatpush1.msra.mxu0 0.0
        %711 = vmatprep.subr.mxu0 0.0
        %712 = vmatpush1.msra.mxu0 0.0
        %713 = vmatprep.subr.mxu0 0.0
        %714 = vmatpush1.msra.mxu0 0.0
        %715 = vmatprep.subr.mxu0 0.0
        %716 = vmatpush1.msra.mxu0 0.0
        %717 = vmatprep.subr.mxu0 0.0
        %718 = vmatpush1.msra.mxu0 0.0
        %719 = vmatprep.subr.mxu0 0.0
        %720 = vmatpush1.msra.mxu0 0.0
        %721 = vmatprep.subr.mxu0 0.0
        %722 = vmatpush1.msra.mxu0 0.0
        %723 = vmatprep.subr.mxu0 0.0
        %724 = vmatpush1.msra.mxu0 0.0
        %725 = vmatprep.subr.mxu0 0.0
        %726 = vmatpush1.msra.mxu0 0.0
        %727 = vmatprep.subr.mxu0 0.0
        %728 = vmatpush1.msra.mxu0 0.0
        %729 = vmatprep.subr.mxu0 0.0
        %730 = vmatpush1.msra.mxu0 0.0
        %731 = vmatprep.subr.mxu0 0.0
        %732 = vmatpush1.msra.mxu0 0.0
        %733 = vmatprep.subr.mxu0 0.0
        %734 = vmatpush1.msra.mxu0 0.0
        %735 = vmatprep.mubr.f32.mxu0 0.0
        %736 = vmatmul.mubr.f32.gmra.mrb[0].mxu0 %v664
        %v737 = vpop.f32.mrb[0].mxu0
        %v738 = vadd.f32 %v669, %v737
        %v739 = vpop.f32.mrb[0].mxu0
        %740 = vdwg.mxu0
        %v741 = vsub.f32 0.0, %v738
        %v742 = vmul.f32 %v741, 1.442695
        %v743 = vpow.pop %v742
        %v744 = vadd.f32 %v743, 1.0
        %v745 = vrcp.pop %v744
        %v746 = vmul.f32 1.0, %v745
        %v747 = vmul.f32 %v738, %v746
        %v748 = vadd.f32 %v747, %v245
        %vm749 = vcmask 130048
        %750 = vst.msk [vmem:[%s237] sm:$0xff] %vm749, %v748
        %s751 = sand.u32 %s153, 1
        %s752 = scalar_lea.sflag [#allocation3], %s751
        %s753 = sand.u32 %s153, 1
        %s754 = smul.addr %s753, 8
        %s755 = scalar_lea.vmem [#allocation2], %s754
        // Predicated region
        $region41: #{tpu_custom_call.1} parent=39 // pred_check
          %p756 = pneg %p163
        $region42: #{tpu_custom_call.1} parent=39 // pred_check_branch
          %758 = sbr.rel (%p756) target = $region44
        $region43: #{tpu_custom_call.1} parent=39 // pred_region
          %s760 = ssub.s32 128, 128
          %761 = vsyncadd %s752, %s760
          %s762 = sadd.s32 %s24, %s23
          %s763 = smul.addr %s762, 128
          %s764 = scalar_lea.hbm %s5, %s763
          %s766 = sshll.u32 %s755, 4
          %s767 = int_to_ptr.vmem [resolvable:$true] %s766
          %769 = dma.vmem_to_hbm [thread:$0]  %s767, 128, %s764, %s752
        $region44: #{tpu_custom_call.1} parent=39 // pred_fallthru
          _
      $region40: #{tpu_custom_call.1} parent=5 // pred_fallthru
        _
      %p770 = scmp.le.s32.totalorder 2, %s14
      // Predicated region
      $region45: #{tpu_custom_call.1} parent=5 // pred_check
        %p771 = pneg %p770
      $region46: #{tpu_custom_call.1} parent=5 // pred_check_branch
        %773 = sbr.rel (%p771) target = $region48
      $region47: #{tpu_custom_call.1} parent=5 // pred_region
        %s774 = ssub.s32 %s14, 2
        // Predicated region
        $region49: #{tpu_custom_call.1} parent=47 // pred_check
          %p775 = pneg %p169
        $region50: #{tpu_custom_call.1} parent=47 // pred_check_branch
          %777 = sbr.rel (%p775) target = $region52
        $region51: #{tpu_custom_call.1} parent=47 // pred_region
          %s778 = sand.u32 %s154, 1
          %s779 = scalar_lea.sflag [#allocation3], %s778
          %s780 = sand.u32 %s154, 1
          %s781 = smul.addr %s780, 8
          %s782 = scalar_lea.vmem [#allocation2], %s781
          %783 = dma.done %s779, 128
        $region52: #{tpu_custom_call.1} parent=47 // pred_fallthru
          _
      $region48: #{tpu_custom_call.1} parent=5 // pred_fallthru
        _
    $region6: #{tpu_custom_call.1} parent=1 // loop_footer
      %s18 = sadd.s32 1, %s14
    $region7: #{tpu_custom_call.1} parent=1 // loop_footer_branch
      %13 = sbr.rel target = $region3
    $region8: #{tpu_custom_call.1} parent=1 // loop_exit
      _
    %784 = vsyncpa [#allocation3], 1
    %s785 = scalar_lea.sflag [#allocation3], 1
    %786 = vsyncpa %s785, 1

// kernel: tpu_custom_call.1
$region0: #{tpu_custom_call.1}
  #allocation0 [shape = 'u32[]', space=smem, size = 0x4, offset = 0x4, fixed_abs, tag = 'smem constant byte address 0x4 - core index']
  #allocation1 [shape = 'u32[144,128]{1,0:T(1,128)}', space=vmem, size = 0x12000, scoped, tag = 'internal scratch']
  %s0 = inlined_call_operand.vmem [shape: f32[2,8,16], index: 0, kind: input, shape index: {}]
  %s1 = inlined_call_operand.vmem [shape: f32[128,8], index: 1, kind: input, shape index: {}]
  %s2 = inlined_call_operand.vmem [shape: f32[128,1], index: 2, kind: input, shape index: {}]
  %s3 = inlined_call_operand.vmem [shape: f32[8,128], index: 3, kind: input, shape index: {}]
  %s4 = inlined_call_operand.vmem [shape: f32[8,1], index: 4, kind: input, shape index: {}]
  %s5 = inlined_call_operand.hbm [shape: f32[2,8,16], index: 5, kind: output, shape index: {}]
  %s6 = sld [smem:[#allocation0]]
  $region53: #{tpu_custom_call.1} parent=0
    _
  %s8 = ssub.s32 1, %s6
  %s9 = scalar_select 0, %s8, %s6
  $region1: #{tpu_custom_call.1} parent=0
    #allocation2 [shape = 'u8[8192]{0}', space=vmem, size = 0x2000, scoped, tag = 'output window, operand 0']
    #allocation3 [shape = 's32[2]{0}', space=sflag, size = 0x8, scoped, tag = 'scoped memory for tpu_custom_call.1']
    %10 = vsyncpa [#allocation3], 0
    %s11 = scalar_lea.sflag [#allocation3], 1
    %12 = vsyncpa %s11, 0
    loop: start=0, step=1, limit=4
    $region2: #{tpu_custom_call.1} parent=1 // loop_pre_header
      _
    $region3: #{tpu_custom_call.1} parent=1 // loop_header
      %s14 = sphi 0, %s18
      %p15 = scmp.ge.s32.totalorder %s14, 4
      %s21 = sphi 0, %s33
      %s22 = sphi 0, %s29
      %s23 = sphi 0, %s21
      %s24 = sphi 0, %s22
      %s25 = sphi 0, %s23
      %s26 = sphi 0, %s24
      %s38 = sphi 0, %s40
      %s41 = sphi 0, %s38
      %s42 = sphi 0, %s41
      %s58 = sphi 0, %s42
      %s62 = sphi 0, %s62
      %s64 = sphi 0, %s62
      %s65 = sphi 0, %s64
      %s79 = sphi 0, %s65
      %s83 = sphi 0, %s83
      %s85 = sphi 0, %s83
      %s86 = sphi 0, %s85
      %s100 = sphi 0, %s86
      %s104 = sphi 0, %s104
      %s106 = sphi 0, %s104
      %s107 = sphi 0, %s106
      %s121 = sphi 0, %s107
      %s125 = sphi 0, %s125
      %s127 = sphi 0, %s125
      %s128 = sphi 0, %s127
      %s142 = sphi 0, %s128
      %s150 = sphi 0, %s152
      %s153 = sphi 0, %s150
      %s154 = sphi 0, %s153
      %s170 = sphi 0, %s154
    $region4: #{tpu_custom_call.1} parent=1 // loop_header_branch
      %17 = sbr.rel (%p15) target = $region8
    $region5: #{tpu_custom_call.1} parent=1 // loop_body
      %s19 = ssub.s32 %s14, 1
      %s20 = ssub.s32 %s14, 2
      %s27 = sadd.s32 1, %s22
      %p28 = scmp.ge.s32.totalorder %s27, 1
      %s29 = scalar_select %p28, 0, %s27
      %s30 = sadd.s32 1, %s21
      %s31 = scalar_select %p28, %s30, %s21
      %p32 = scmp.ge.s32.totalorder %s31, 2
      %s33 = scalar_select %p32, 0, %s31
      %s34 = ssub.s32 %s21, %s33
      %s35 = ssub.s32 %s22, %s29
      %s36 = sor.u32 %s34, %s35
      %p37 = scmp.eq.s32.totalorder %s36, 0
      %s39 = sadd.s32 %s38, 1
      %s40 = scalar_select %p37, %s38, %s39
      %p43 = pneg %p37
      %p44 = scmp.eq.s32.totalorder %s14, 1
      %p45 = por %p43, %p44
      %p46 = scmp.ne.s32.totalorder %s38, %s41
      %p47 = scmp.eq.s32.totalorder %s14, 0
      %p48 = por %p46, %p47
      %p49 = scmp.ne.s32.totalorder %s38, %s41
      %p50 = scmp.eq.s32.totalorder %s19, 1
      %p51 = por %p49, %p50
      %p52 = scmp.ne.s32.totalorder %s41, %s42
      %p53 = scmp.eq.s32.totalorder %s19, 0
      %p54 = por %p52, %p53
      %p55 = scmp.ne.s32.totalorder %s41, %s42
      %p56 = scmp.eq.s32.totalorder %s20, 1
      %p57 = por %p55, %p56
      %p59 = scmp.ne.s32.totalorder %s42, %s58
      %p60 = scmp.eq.s32.totalorder %s20, 0
      %p61 = por %p59, %p60
      %s63 = sadd.s32 %s62, 1
      %p66 = scmp.eq.s32.totalorder %s14, 1
      %p67 = scmp.ne.s32.totalorder %s62, %s64
      %p68 = scmp.eq.s32.totalorder %s14, 0
      %p69 = por %p67, %p68
      %p70 = scmp.ne.s32.totalorder %s62, %s64
      %p71 = scmp.eq.s32.totalorder %s19, 1
      %p72 = por %p70, %p71
      %p73 = scmp.ne.s32.totalorder %s64, %s65
      %p74 = scmp.eq.s32.totalorder %s19, 0
      %p75 = por %p73, %p74
      %p76 = scmp.ne.s32.totalorder %s64, %s65
      %p77 = scmp.eq.s32.totalorder %s20, 1
      %p78 = por %p76, %p77
      %p80 = scmp.ne.s32.totalorder %s65, %s79
      %p81 = scmp.eq.s32.totalorder %s20, 0
      %p82 = por %p80, %p81
      %s84 = sadd.s32 %s83, 1
      %p87 = scmp.eq.s32.totalorder %s14, 1
      %p88 = scmp.ne.s32.totalorder %s83, %s85
      %p89 = scmp.eq.s32.totalorder %s14, 0
      %p90 = por %p88, %p89
      %p91 = scmp.ne.s32.totalorder %s83, %s85
      %p92 = scmp.eq.s32.totalorder %s19, 1
      %p93 = por %p91, %p92
      %p94 = scmp.ne.s32.totalorder %s85, %s86
      %p95 = scmp.eq.s32.totalorder %s19, 0
      %p96 = por %p94, %p95
      %p97 = scmp.ne.s32.totalorder %s85, %s86
      %p98 = scmp.eq.s32.totalorder %s20, 1
      %p99 = por %p97, %p98
      %p101 = scmp.ne.s32.totalorder %s86, %s100
      %p102 = scmp.eq.s32.totalorder %s20, 0
      %p103 = por %p101, %p102
      %s105 = sadd.s32 %s104, 1
      %p108 = scmp.eq.s32.totalorder %s14, 1
      %p109 = scmp.ne.s32.totalorder %s104, %s106
      %p110 = scmp.eq.s32.totalorder %s14, 0
      %p111 = por %p109, %p110
      %p112 = scmp.ne.s32.totalorder %s104, %s106
      %p113 = scmp.eq.s32.totalorder %s19, 1
      %p114 = por %p112, %p113
      %p115 = scmp.ne.s32.totalorder %s106, %s107
      %p116 = scmp.eq.s32.totalorder %s19, 0
      %p117 = por %p115, %p116
      %p118 = scmp.ne.s32.totalorder %s106, %s107
      %p119 = scmp.eq.s32.totalorder %s20, 1
      %p120 = por %p118, %p119
      %p122 = scmp.ne.s32.totalorder %s107, %s121
      %p123 = scmp.eq.s32.totalorder %s20, 0
      %p124 = por %p122, %p123
      %s126 = sadd.s32 %s125, 1
      %p129 = scmp.eq.s32.totalorder %s14, 1
      %p130 = scmp.ne.s32.totalorder %s125, %s127
      %p131 = scmp.eq.s32.totalorder %s14, 0
      %p132 = por %p130, %p131
      %p133 = scmp.ne.s32.totalorder %s125, %s127
      %p134 = scmp.eq.s32.totalorder %s19, 1
      %p135 = por %p133, %p134
      %p136 = scmp.ne.s32.totalorder %s127, %s128
      %p137 = scmp.eq.s32.totalorder %s19, 0
      %p138 = por %p136, %p137
      %p139 = scmp.ne.s32.totalorder %s127, %s128
      %p140 = scmp.eq.s32.totalorder %s20, 1
      %p141 = por %p139, %p140
      %p143 = scmp.ne.s32.totalorder %s128, %s142
      %p144 = scmp.eq.s32.totalorder %s20, 0
      %p145 = por %p143, %p144
      %s146 = ssub.s32 %s21, %s33
      %s147 = ssub.s32 %s22, %s29
      %s148 = sor.u32 %s146, %s147
      %p149 = scmp.eq.s32.totalorder %s148, 0
      %s151 = sadd.s32 %s150, 1
      %s152 = scalar_select %p149, %s150, %s151
      %p155 = pneg %p149
      %p156 = scmp.eq.s32.totalorder %s14, 1
      %p157 = por %p155, %p156
      %p158 = scmp.ne.s32.totalorder %s150, %s153
      %p159 = scmp.eq.s32.totalorder %s14, 0
      %p160 = por %p158, %p159
      %p161 = scmp.ne.s32.totalorder %s150, %s153
      %p162 = scmp.eq.s32.totalorder %s19, 1
      %p163 = por %p161, %p162
      %p164 = scmp.ne.s32.totalorder %s153, %s154
      %p165 = scmp.eq.s32.totalorder %s19, 0
      %p166 = por %p164, %p165
      %p167 = scmp.ne.s32.totalorder %s153, %s154
      %p168 = scmp.eq.s32.totalorder %s20, 1
      %p169 = por %p167, %p168
      %p171 = scmp.ne.s32.totalorder %s154, %s170
      %p172 = scmp.eq.s32.totalorder %s20, 0
      %p173 = por %p171, %p172
      %p174 = scmp.le.s32.totalorder 1, %s14
      %p175 = scmp.lt.s32.totalorder %s14, 3
      %p176 = pnand %p174, %p175
      %p177 = pneg %p176
      // Predicated region
      $region9: #{tpu_custom_call.1} parent=5 // pred_check
        _
      $region10: #{tpu_custom_call.1} parent=5 // pred_check_branch
        %179 = sbr.rel (%p176) target = $region12
      $region11: #{tpu_custom_call.1} parent=5 // pred_region
        %s180 = ssub.s32 %s14, 1
        // Predicated region
        $region13: #{tpu_custom_call.1} parent=11 // pred_check
          %p181 = pneg %p75
        $region14: #{tpu_custom_call.1} parent=11 // pred_check_branch
          %183 = sbr.rel (%p181) target = $region16
        $region15: #{tpu_custom_call.1} parent=11 // pred_region
          _
        $region16: #{tpu_custom_call.1} parent=11 // pred_fallthru
          _
        // Predicated region
        $region17: #{tpu_custom_call.1} parent=11 // pred_check
          %p184 = pneg %p96
        $region18: #{tpu_custom_call.1} parent=11 // pred_check_branch
          %186 = sbr.rel (%p184) target = $region20
        $region19: #{tpu_custom_call.1} parent=11 // pred_region
          _
        $region20: #{tpu_custom_call.1} parent=11 // pred_fallthru
          _
        // Predicated region
        $region21: #{tpu_custom_call.1} parent=11 // pred_check
          %p187 = pneg %p117
        $region22: #{tpu_custom_call.1} parent=11 // pred_check_branch
          %189 = sbr.rel (%p187) target = $region24
        $region23: #{tpu_custom_call.1} parent=11 // pred_region
          _
        $region24: #{tpu_custom_call.1} parent=11 // pred_fallthru
          _
        // Predicated region
        $region25: #{tpu_custom_call.1} parent=11 // pred_check
          %p190 = pneg %p138
        $region26: #{tpu_custom_call.1} parent=11 // pred_check_branch
          %192 = sbr.rel (%p190) target = $region28
        $region27: #{tpu_custom_call.1} parent=11 // pred_region
          _
        $region28: #{tpu_custom_call.1} parent=11 // pred_fallthru
          _
      $region12: #{tpu_custom_call.1} parent=5 // pred_fallthru
        _
      %p193 = scmp.lt.s32.totalorder %s14, 2
      // Predicated region
      $region29: #{tpu_custom_call.1} parent=5 // pred_check
        %p194 = pneg %p193
      $region30: #{tpu_custom_call.1} parent=5 // pred_check_branch
        %196 = sbr.rel (%p194) target = $region32
      $region31: #{tpu_custom_call.1} parent=5 // pred_region
        // Predicated region
        $region33: #{tpu_custom_call.1} parent=31 // pred_check
          %p197 = pneg %p48
        $region34: #{tpu_custom_call.1} parent=31 // pred_check_branch
          %199 = sbr.rel (%p197) target = $region36
        $region35: #{tpu_custom_call.1} parent=31 // pred_region
          %p200 = scmp.lt.s32.totalorder %s21, 1
          %s201 = scalar_select %p200, %s21, 1
          %p202 = scmp.lt.s32.totalorder %s22, 0
          %s203 = scalar_select %p202, %s22, 0
          %s204 = sadd.s32 %s203, %s201
          %s205 = smul.addr %s204, 8
          %s206 = scalar_lea.vmem %s0, %s205
        $region36: #{tpu_custom_call.1} parent=31 // pred_fallthru
          _
      $region32: #{tpu_custom_call.1} parent=5 // pred_fallthru
        _
      %p207 = scmp.le.s32.totalorder 1, %s14
      %p208 = scmp.lt.s32.totalorder %s14, 3
      %p209 = pnand %p207, %p208
      %p210 = pneg %p209
      // Predicated region
      $region37: #{tpu_custom_call.1} parent=5 // pred_check
        _
      $region38: #{tpu_custom_call.1} parent=5 // pred_check_branch
        %212 = sbr.rel (%p209) target = $region40
      $region39: #{tpu_custom_call.1} parent=5 // pred_region
        %s213 = ssub.s32 %s14, 1
        %p214 = scmp.lt.s32.totalorder %s23, 1
        %s215 = scalar_select %p214, %s23, 1
        %p216 = scmp.lt.s32.totalorder %s24, 0
        %s217 = scalar_select %p216, %s24, 0
        %s218 = sadd.s32 %s217, %s215
        %s219 = smul.addr %s218, 8
        %s220 = scalar_lea.vmem %s0, %s219
        %p221 = pneg %p54
        %p222 = pneg %p51
        %p223 = pneg %p75
        %p224 = pneg %p72
        %p225 = pneg %p96
        %p226 = pneg %p93
        %p227 = pneg %p117
        %p228 = pneg %p114
        %p229 = pneg %p138
        %p230 = pneg %p135
        %p231 = pneg %p166
        %p232 = pneg %p163
        %s233 = sand.u32 %s153, 1
        %s234 = scalar_lea.sflag [#allocation3], %s233
        %s235 = sand.u32 %s153, 1
        %s236 = smul.addr %s235, 8
        %s237 = scalar_lea.vmem [#allocation2], %s236
        %p238 = scmp.lt.s32.totalorder %s23, 1
        %s239 = scalar_select %p238, %s23, 1
        %p240 = scmp.lt.s32.totalorder %s24, 0
        %s241 = scalar_select %p240, %s24, 0
        %s242 = sadd.s32 %s241, %s239
        %s243 = smul.addr %s242, 8
        %s244 = scalar_lea.vmem %s0, %s243
        %v245 = vld [vmem:[%s244] sm:$0xff]
        %v246 = vld [vmem:[%s1] sm:$0xff]
        %v247 = vld [vmem:[%s1 + $0x8] sm:$0xff]
        %v248 = vld [vmem:[%s1 + $0x10] sm:$0xff]
        %v249 = vld [vmem:[%s1 + $0x18] sm:$0xff]
        %v250 = vld [vmem:[%s1 + $0x20] sm:$0xff]
        %v251 = vld [vmem:[%s1 + $0x28] sm:$0xff]
        %v252 = vld [vmem:[%s1 + $0x30] sm:$0xff]
        %v253 = vld [vmem:[%s1 + $0x38] sm:$0xff]
        %v254 = vld [vmem:[%s1 + $0x40] sm:$0xff]
        %v255 = vld [vmem:[%s1 + $0x48] sm:$0xff]
        %v256 = vld [vmem:[%s1 + $0x50] sm:$0xff]
        %v257 = vld [vmem:[%s1 + $0x58] sm:$0xff]
        %v258 = vld [vmem:[%s1 + $0x60] sm:$0xff]
        %v259 = vld [vmem:[%s1 + $0x68] sm:$0xff]
        %v260 = vld [vmem:[%s1 + $0x70] sm:$0xff]
        %v261 = vld [vmem:[%s1 + $0x78] sm:$0xff]
        %v262 = vld [vmem:[%s2] sm:$0xff]
        %v263 = vld [vmem:[%s2 + $0x8] sm:$0xff]
        %v264 = vld [vmem:[%s2 + $0x10] sm:$0xff]
        %v265 = vld [vmem:[%s2 + $0x18] sm:$0xff]
        %v266 = vld [vmem:[%s2 + $0x20] sm:$0xff]
        %v267 = vld [vmem:[%s2 + $0x28] sm:$0xff]
        %v268 = vld [vmem:[%s2 + $0x30] sm:$0xff]
        %v269 = vld [vmem:[%s2 + $0x38] sm:$0xff]
        %v270 = vld [vmem:[%s2 + $0x40] sm:$0xff]
        %v271 = vld [vmem:[%s2 + $0x48] sm:$0xff]
        %v272 = vld [vmem:[%s2 + $0x50] sm:$0xff]
        %v273 = vld [vmem:[%s2 + $0x58] sm:$0xff]
        %v274 = vld [vmem:[%s2 + $0x60] sm:$0xff]
        %v275 = vld [vmem:[%s2 + $0x68] sm:$0xff]
        %v276 = vld [vmem:[%s2 + $0x70] sm:$0xff]
        %v277 = vld [vmem:[%s2 + $0x78] sm:$0xff]
        %279 = vset.pattern.permute.xlu0 0
        %280 = vperm.xlu0 %279, %v262
        %v281 = vpop.permute.xlu0 %280
        %284 = vset.pattern.permute.xlu0 0
        %285 = vperm.xlu0 %284, %v263
        %v286 = vpop.permute.xlu0 %285
        %289 = vset.pattern.permute.xlu0 0
        %290 = vperm.xlu0 %289, %v264
        %v291 = vpop.permute.xlu0 %290
        %294 = vset.pattern.permute.xlu0 0
        %295 = vperm.xlu0 %294, %v265
        %v296 = vpop.permute.xlu0 %295
        %299 = vset.pattern.permute.xlu0 0
        %300 = vperm.xlu0 %299, %v266
        %v301 = vpop.permute.xlu0 %300
        %304 = vset.pattern.permute.xlu0 0
        %305 = vperm.xlu0 %304, %v267
        %v306 = vpop.permute.xlu0 %305
        %309 = vset.pattern.permute.xlu0 0
        %310 = vperm.xlu0 %309, %v268
        %v311 = vpop.permute.xlu0 %310
        %314 = vset.pattern.permute.xlu0 0
        %315 = vperm.xlu0 %314, %v269
        %v316 = vpop.permute.xlu0 %315
        %319 = vset.pattern.permute.xlu0 0
        %320 = vperm.xlu0 %319, %v270
        %v321 = vpop.permute.xlu0 %320
        %324 = vset.pattern.permute.xlu0 0
        %325 = vperm.xlu0 %324, %v271
        %v326 = vpop.permute.xlu0 %325
        %329 = vset.pattern.permute.xlu0 0
        %330 = vperm.xlu0 %329, %v272
        %v331 = vpop.permute.xlu0 %330
        %334 = vset.pattern.permute.xlu0 0
        %335 = vperm.xlu0 %334, %v273
        %v336 = vpop.permute.xlu0 %335
        %339 = vset.pattern.permute.xlu0 0
        %340 = vperm.xlu0 %339, %v274
        %v341 = vpop.permute.xlu0 %340
        %344 = vset.pattern.permute.xlu0 0
        %345 = vperm.xlu0 %344, %v275
        %v346 = vpop.permute.xlu0 %345
        %349 = vset.pattern.permute.xlu0 0
        %350 = vperm.xlu0 %349, %v276
        %v351 = vpop.permute.xlu0 %350
        %354 = vset.pattern.permute.xlu0 0
        %355 = vperm.xlu0 %354, %v277
        %v356 = vpop.permute.xlu0 %355
        %vm358 = vcmask 64512
        %v360 = vsel %vm358, %v246, 0
        %v363 = vsel %vm358, %v247, 0
        %v366 = vsel %vm358, %v248, 0
        %v369 = vsel %vm358, %v249, 0
        %v372 = vsel %vm358, %v250, 0
        %v375 = vsel %vm358, %v251, 0
        %v378 = vsel %vm358, %v252, 0
        %v381 = vsel %vm358, %v253, 0
        %v384 = vsel %vm358, %v254, 0
        %v387 = vsel %vm358, %v255, 0
        %v390 = vsel %vm358, %v256, 0
        %v393 = vsel %vm358, %v257, 0
        %v396 = vsel %vm358, %v258, 0
        %v399 = vsel %vm358, %v259, 0
        %v402 = vsel %vm358, %v260, 0
        %v405 = vsel %vm358, %v261, 0
        %407 = vmatprep.subr.mxu0 0.0
        %408 = vmatpush1.msra.mxu0 %v245
        %409 = vmatprep.subr.mxu0 0.0
        %410 = vmatpush1.msra.mxu0 0.0
        %411 = vmatprep.subr.mxu0 0.0
        %412 = vmatpush1.msra.mxu0 0.0
        %413 = vmatprep.subr.mxu0 0.0
        %414 = vmatpush1.msra.mxu0 0.0
        %415 = vmatprep.subr.mxu0 0.0
        %416 = vmatpush1.msra.mxu0 0.0
        %417 = vmatprep.subr.mxu0 0.0
        %418 = vmatpush1.msra.mxu0 0.0
        %419 = vmatprep.subr.mxu0 0.0
        %420 = vmatpush1.msra.mxu0 0.0
        %421 = vmatprep.subr.mxu0 0.0
        %422 = vmatpush1.msra.mxu0 0.0
        %423 = vmatprep.subr.mxu0 0.0
        %424 = vmatpush1.msra.mxu0 0.0
        %425 = vmatprep.subr.mxu0 0.0
        %426 = vmatpush1.msra.mxu0 0.0
        %427 = vmatprep.subr.mxu0 0.0
        %428 = vmatpush1.msra.mxu0 0.0
        %429 = vmatprep.subr.mxu0 0.0
        %430 = vmatpush1.msra.mxu0 0.0
        %431 = vmatprep.subr.mxu0 0.0
        %432 = vmatpush1.msra.mxu0 0.0
        %433 = vmatprep.subr.mxu0 0.0
        %434 = vmatpush1.msra.mxu0 0.0
        %435 = vmatprep.subr.mxu0 0.0
        %436 = vmatpush1.msra.mxu0 0.0
        %437 = vmatprep.subr.mxu0 0.0
        %438 = vmatpush1.msra.mxu0 0.0
        %439 = vmatprep.subr.mxu0 0.0
        %440 = vmatpush1.msra.mxu0 0.0
        %441 = vmatprep.subr.mxu0 0.0
        %442 = vmatpush1.msra.mxu0 0.0
        %443 = vmatprep.subr.mxu0 0.0
        %444 = vmatpush1.msra.mxu0 0.0
        %445 = vmatprep.subr.mxu0 0.0
        %446 = vmatpush1.msra.mxu0 0.0
        %447 = vmatprep.subr.mxu0 0.0
        %448 = vmatpush1.msra.mxu0 0.0
        %449 = vmatprep.subr.mxu0 0.0
        %450 = vmatpush1.msra.mxu0 0.0
        %451 = vmatprep.subr.mxu0 0.0
        %452 = vmatpush1.msra.mxu0 0.0
        %453 = vmatprep.subr.mxu0 0.0
        %454 = vmatpush1.msra.mxu0 0.0
        %455 = vmatprep.subr.mxu0 0.0
        %456 = vmatpush1.msra.mxu0 0.0
        %457 = vmatprep.subr.mxu0 0.0
        %458 = vmatpush1.msra.mxu0 0.0
        %459 = vmatprep.subr.mxu0 0.0
        %460 = vmatpush1.msra.mxu0 0.0
        %461 = vmatprep.subr.mxu0 0.0
        %462 = vmatpush1.msra.mxu0 0.0
        %463 = vmatprep.subr.mxu0 0.0
        %464 = vmatpush1.msra.mxu0 0.0
        %465 = vmatprep.subr.mxu0 0.0
        %466 = vmatpush1.msra.mxu0 0.0
        %467 = vmatprep.subr.mxu0 0.0
        %468 = vmatpush1.msra.mxu0 0.0
        %469 = vmatprep.subr.mxu0 0.0
        %470 = vmatpush1.msra.mxu0 0.0
        %471 = vmatprep.mubr.f32.mxu0 0.0
        %472 = vmatmul.mubr.f32.gmra.mrb[0].mxu0 %v360
        %v473 = vpop.f32.mrb[0].mxu0
        %v474 = vadd.f32 %v281, %v473
        %v475 = vpop.f32.mrb[0].mxu0
        %476 = vmatprep.mubr.f32.mxu0 0.0
        %477 = vmatmul.mubr.f32.gmra.mrb[0].mxu0 %v363
        %v478 = vpop.f32.mrb[0].mxu0
        %v479 = vadd.f32 %v286, %v478
        %v480 = vpop.f32.mrb[0].mxu0
        %481 = vmatprep.mubr.f32.mxu0 0.0
        %482 = vmatmul.mubr.f32.gmra.mrb[0].mxu0 %v366
        %v483 = vpop.f32.mrb[0].mxu0
        %v484 = vadd.f32 %v291, %v483
        %v485 = vpop.f32.mrb[0].mxu0
        %486 = vmatprep.mubr.f32.mxu0 0.0
        %487 = vmatmul.mubr.f32.gmra.mrb[0].mxu0 %v369
        %v488 = vpop.f32.mrb[0].mxu0
        %v489 = vadd.f32 %v296, %v488
        %v490 = vpop.f32.mrb[0].mxu0
        %491 = vmatprep.mubr.f32.mxu0 0.0
        %492 = vmatmul.mubr.f32.gmra.mrb[0].mxu0 %v372
        %v493 = vpop.f32.mrb[0].mxu0
        %v494 = vadd.f32 %v301, %v493
        %v495 = vpop.f32.mrb[0].mxu0
        %496 = vmatprep.mubr.f32.mxu0 0.0
        %497 = vmatmul.mubr.f32.gmra.mrb[0].mxu0 %v375
        %v498 = vpop.f32.mrb[0].mxu0
        %v499 = vadd.f32 %v306, %v498
        %v500 = vpop.f32.mrb[0].mxu0
        %501 = vmatprep.mubr.f32.mxu0 0.0
        %502 = vmatmul.mubr.f32.gmra.mrb[0].mxu0 %v378
        %v503 = vpop.f32.mrb[0].mxu0
        %v504 = vadd.f32 %v311, %v503
        %v505 = vpop.f32.mrb[0].mxu0
        %506 = vmatprep.mubr.f32.mxu0 0.0
        %507 = vmatmul.mubr.f32.gmra.mrb[0].mxu0 %v381
        %v508 = vpop.f32.mrb[0].mxu0
        %v509 = vadd.f32 %v316, %v508
        %v510 = vpop.f32.mrb[0].mxu0
        %511 = vmatprep.mubr.f32.mxu0 0.0
        %512 = vmatmul.mubr.f32.gmra.mrb[0].mxu0 %v384
        %v513 = vpop.f32.mrb[0].mxu0
        %v514 = vadd.f32 %v321, %v513
        %v515 = vpop.f32.mrb[0].mxu0
        %516 = vmatprep.mubr.f32.mxu0 0.0
        %517 = vmatmul.mubr.f32.gmra.mrb[0].mxu0 %v387
        %v518 = vpop.f32.mrb[0].mxu0
        %v519 = vadd.f32 %v326, %v518
        %v520 = vpop.f32.mrb[0].mxu0
        %521 = vmatprep.mubr.f32.mxu0 0.0
        %522 = vmatmul.mubr.f32.gmra.mrb[0].mxu0 %v390
        %v523 = vpop.f32.mrb[0].mxu0
        %v524 = vadd.f32 %v331, %v523
        %v525 = vpop.f32.mrb[0].mxu0
        %526 = vmatprep.mubr.f32.mxu0 0.0
        %527 = vmatmul.mubr.f32.gmra.mrb[0].mxu0 %v393
        %v528 = vpop.f32.mrb[0].mxu0
        %v529 = vadd.f32 %v336, %v528
        %v530 = vpop.f32.mrb[0].mxu0
        %531 = vmatprep.mubr.f32.mxu0 0.0
        %532 = vmatmul.mubr.f32.gmra.mrb[0].mxu0 %v396
        %v533 = vpop.f32.mrb[0].mxu0
        %v534 = vadd.f32 %v341, %v533
        %v535 = vpop.f32.mrb[0].mxu0
        %536 = vmatprep.mubr.f32.mxu0 0.0
        %537 = vmatmul.mubr.f32.gmra.mrb[0].mxu0 %v399
        %v538 = vpop.f32.mrb[0].mxu0
        %v539 = vadd.f32 %v346, %v538
        %v540 = vpop.f32.mrb[0].mxu0
        %541 = vmatprep.mubr.f32.mxu0 0.0
        %542 = vmatmul.mubr.f32.gmra.mrb[0].mxu0 %v402
        %v543 = vpop.f32.mrb[0].mxu0
        %v544 = vadd.f32 %v351, %v543
        %v545 = vpop.f32.mrb[0].mxu0
        %546 = vmatprep.mubr.f32.mxu0 0.0
        %547 = vmatmul.mubr.f32.gmra.mrb[0].mxu0 %v405
        %v548 = vpop.f32.mrb[0].mxu0
        %v549 = vadd.f32 %v356, %v548
        %v550 = vpop.f32.mrb[0].mxu0
        %551 = vdwg.mxu0
        %v552 = vsub.f32 0.0, %v474
        %v553 = vsub.f32 0.0, %v479
        %v554 = vsub.f32 0.0, %v484
        %v555 = vsub.f32 0.0, %v489
        %v556 = vsub.f32 0.0, %v494
        %v557 = vsub.f32 0.0, %v499
        %v558 = vsub.f32 0.0, %v504
        %v559 = vsub.f32 0.0, %v509
        %v560 = vsub.f32 0.0, %v514
        %v561 = vsub.f32 0.0, %v519
        %v562 = vsub.f32 0.0, %v524
        %v563 = vsub.f32 0.0, %v529
        %v564 = vsub.f32 0.0, %v534
        %v565 = vsub.f32 0.0, %v539
        %v566 = vsub.f32 0.0, %v544
        %v567 = vsub.f32 0.0, %v549
        %v568 = vmul.f32 %v552, 1.442695
        %v569 = vpow.pop %v568
        %v570 = vmul.f32 %v553, 1.442695
        %v571 = vpow.pop %v570
        %v572 = vmul.f32 %v554, 1.442695
        %v573 = vpow.pop %v572
        %v574 = vmul.f32 %v555, 1.442695
        %v575 = vpow.pop %v574
        %v576 = vmul.f32 %v556, 1.442695
        %v577 = vpow.pop %v576
        %v578 = vmul.f32 %v557, 1.442695
        %v579 = vpow.pop %v578
        %v580 = vmul.f32 %v558, 1.442695
        %v581 = vpow.pop %v580
        %v582 = vmul.f32 %v559, 1.442695
        %v583 = vpow.pop %v582
        %v584 = vmul.f32 %v560, 1.442695
        %v585 = vpow.pop %v584
        %v586 = vmul.f32 %v561, 1.442695
        %v587 = vpow.pop %v586
        %v588 = vmul.f32 %v562, 1.442695
        %v589 = vpow.pop %v588
        %v590 = vmul.f32 %v563, 1.442695
        %v591 = vpow.pop %v590
        %v592 = vmul.f32 %v564, 1.442695
        %v593 = vpow.pop %v592
        %v594 = vmul.f32 %v565, 1.442695
        %v595 = vpow.pop %v594
        %v596 = vmul.f32 %v566, 1.442695
        %v597 = vpow.pop %v596
        %v598 = vmul.f32 %v567, 1.442695
        %v599 = vpow.pop %v598
        %v600 = vadd.f32 %v569, 1.0
        %v601 = vadd.f32 %v571, 1.0
        %v602 = vadd.f32 %v573, 1.0
        %v603 = vadd.f32 %v575, 1.0
        %v604 = vadd.f32 %v577, 1.0
        %v605 = vadd.f32 %v579, 1.0
        %v606 = vadd.f32 %v581, 1.0
        %v607 = vadd.f32 %v583, 1.0
        %v608 = vadd.f32 %v585, 1.0
        %v609 = vadd.f32 %v587, 1.0
        %v610 = vadd.f32 %v589, 1.0
        %v611 = vadd.f32 %v591, 1.0
        %v612 = vadd.f32 %v593, 1.0
        %v613 = vadd.f32 %v595, 1.0
        %v614 = vadd.f32 %v597, 1.0
        %v615 = vadd.f32 %v599, 1.0
        %v616 = vrcp.pop %v600
        %v617 = vmul.f32 1.0, %v616
        %v618 = vrcp.pop %v601
        %v619 = vmul.f32 1.0, %v618
        %v620 = vrcp.pop %v602
        %v621 = vmul.f32 1.0, %v620
        %v622 = vrcp.pop %v603
        %v623 = vmul.f32 1.0, %v622
        %v624 = vrcp.pop %v604
        %v625 = vmul.f32 1.0, %v624
        %v626 = vrcp.pop %v605
        %v627 = vmul.f32 1.0, %v626
        %v628 = vrcp.pop %v606
        %v629 = vmul.f32 1.0, %v628
        %v630 = vrcp.pop %v607
        %v631 = vmul.f32 1.0, %v630
        %v632 = vrcp.pop %v608
        %v633 = vmul.f32 1.0, %v632
        %v634 = vrcp.pop %v609
        %v635 = vmul.f32 1.0, %v634
        %v636 = vrcp.pop %v610
        %v637 = vmul.f32 1.0, %v636
        %v638 = vrcp.pop %v611
        %v639 = vmul.f32 1.0, %v638
        %v640 = vrcp.pop %v612
        %v641 = vmul.f32 1.0, %v640
        %v642 = vrcp.pop %v613
        %v643 = vmul.f32 1.0, %v642
        %v644 = vrcp.pop %v614
        %v645 = vmul.f32 1.0, %v644
        %v646 = vrcp.pop %v615
        %v647 = vmul.f32 1.0, %v646
        %v648 = vmul.f32 %v474, %v617
        %v649 = vmul.f32 %v479, %v619
        %v650 = vmul.f32 %v484, %v621
        %v651 = vmul.f32 %v489, %v623
        %v652 = vmul.f32 %v494, %v625
        %v653 = vmul.f32 %v499, %v627
        %v654 = vmul.f32 %v504, %v629
        %v655 = vmul.f32 %v509, %v631
        %v656 = vmul.f32 %v514, %v633
        %v657 = vmul.f32 %v519, %v635
        %v658 = vmul.f32 %v524, %v637
        %v659 = vmul.f32 %v529, %v639
        %v660 = vmul.f32 %v534, %v641
        %v661 = vmul.f32 %v539, %v643
        %v662 = vmul.f32 %v544, %v645
        %v663 = vmul.f32 %v549, %v647
        %v664 = vld [vmem:[%s3] sm:$0xff]
        %v665 = vld [vmem:[%s4] sm:$0xff]
        %667 = vset.pattern.permute.xlu0 0
        %668 = vperm.xlu0 %667, %v665
        %v669 = vpop.permute.xlu0 %668
        %671 = vmatprep.subr.mxu0 0.0
        %672 = vmatpush1.msra.mxu0 %v648
        %673 = vmatprep.subr.mxu0 0.0
        %674 = vmatpush1.msra.mxu0 %v649
        %675 = vmatprep.subr.mxu0 0.0
        %676 = vmatpush1.msra.mxu0 %v650
        %677 = vmatprep.subr.mxu0 0.0
        %678 = vmatpush1.msra.mxu0 %v651
        %679 = vmatprep.subr.mxu0 0.0
        %680 = vmatpush1.msra.mxu0 %v652
        %681 = vmatprep.subr.mxu0 0.0
        %682 = vmatpush1.msra.mxu0 %v653
        %683 = vmatprep.subr.mxu0 0.0
        %684 = vmatpush1.msra.mxu0 %v654
        %685 = vmatprep.subr.mxu0 0.0
        %686 = vmatpush1.msra.mxu0 %v655
        %687 = vmatprep.subr.mxu0 0.0
        %688 = vmatpush1.msra.mxu0 %v656
        %689 = vmatprep.subr.mxu0 0.0
        %690 = vmatpush1.msra.mxu0 %v657
        %691 = vmatprep.subr.mxu0 0.0
        %692 = vmatpush1.msra.mxu0 %v658
        %693 = vmatprep.subr.mxu0 0.0
        %694 = vmatpush1.msra.mxu0 %v659
        %695 = vmatprep.subr.mxu0 0.0
        %696 = vmatpush1.msra.mxu0 %v660
        %697 = vmatprep.subr.mxu0 0.0
        %698 = vmatpush1.msra.mxu0 %v661
        %699 = vmatprep.subr.mxu0 0.0
        %700 = vmatpush1.msra.mxu0 %v662
        %701 = vmatprep.subr.mxu0 0.0
        %702 = vmatpush1.msra.mxu0 %v663
        %703 = vmatprep.subr.mxu0 0.0
        %704 = vmatpush1.msra.mxu0 0.0
        %705 = vmatprep.subr.mxu0 0.0
        %706 = vmatpush1.msra.mxu0 0.0
        %707 = vmatprep.subr.mxu0 0.0
        %708 = vmatpush1.msra.mxu0 0.0
        %709 = vmatprep.subr.mxu0 0.0
        %710 = vmatpush1.msra.mxu0 0.0
        %711 = vmatprep.subr.mxu0 0.0
        %712 = vmatpush1.msra.mxu0 0.0
        %713 = vmatprep.subr.mxu0 0.0
        %714 = vmatpush1.msra.mxu0 0.0
        %715 = vmatprep.subr.mxu0 0.0
        %716 = vmatpush1.msra.mxu0 0.0
        %717 = vmatprep.subr.mxu0 0.0
        %718 = vmatpush1.msra.mxu0 0.0
        %719 = vmatprep.subr.mxu0 0.0
        %720 = vmatpush1.msra.mxu0 0.0
        %721 = vmatprep.subr.mxu0 0.0
        %722 = vmatpush1.msra.mxu0 0.0
        %723 = vmatprep.subr.mxu0 0.0
        %724 = vmatpush1.msra.mxu0 0.0
        %725 = vmatprep.subr.mxu0 0.0
        %726 = vmatpush1.msra.mxu0 0.0
        %727 = vmatprep.subr.mxu0 0.0
        %728 = vmatpush1.msra.mxu0 0.0
        %729 = vmatprep.subr.mxu0 0.0
        %730 = vmatpush1.msra.mxu0 0.0
        %731 = vmatprep.subr.mxu0 0.0
        %732 = vmatpush1.msra.mxu0 0.0
        %733 = vmatprep.subr.mxu0 0.0
        %734 = vmatpush1.msra.mxu0 0.0
        %735 = vmatprep.mubr.f32.mxu0 0.0
        %736 = vmatmul.mubr.f32.gmra.mrb[0].mxu0 %v664
        %v737 = vpop.f32.mrb[0].mxu0
        %v738 = vadd.f32 %v669, %v737
        %v739 = vpop.f32.mrb[0].mxu0
        %740 = vdwg.mxu0
        %v741 = vsub.f32 0.0, %v738
        %v742 = vmul.f32 %v741, 1.442695
        %v743 = vpow.pop %v742
        %v744 = vadd.f32 %v743, 1.0
        %v745 = vrcp.pop %v744
        %v746 = vmul.f32 1.0, %v745
        %v747 = vmul.f32 %v738, %v746
        %v748 = vadd.f32 %v747, %v245
        %vm749 = vcmask 130048
        %750 = vst.msk [vmem:[%s237] sm:$0xff] %vm749, %v748
        %s751 = sand.u32 %s153, 1
        %s752 = scalar_lea.sflag [#allocation3], %s751
        %s753 = sand.u32 %s153, 1
        %s754 = smul.addr %s753, 8
        %s755 = scalar_lea.vmem [#allocation2], %s754
        // Predicated region
        $region41: #{tpu_custom_call.1} parent=39 // pred_check
          %p756 = pneg %p163
        $region42: #{tpu_custom_call.1} parent=39 // pred_check_branch
          %758 = sbr.rel (%p756) target = $region44
        $region43: #{tpu_custom_call.1} parent=39 // pred_region
          %s760 = ssub.s32 128, 128
          %761 = vsyncadd %s752, %s760
          %s762 = sadd.s32 %s24, %s23
          %s763 = smul.addr %s762, 128
          %s764 = scalar_lea.hbm %s5, %s763
          %s766 = sshll.u32 %s755, 4
          %s767 = int_to_ptr.vmem [resolvable:$true] %s766
          %769 = dma.vmem_to_hbm [thread:$0]  %s767, 128, %s764, %s752
        $region44: #{tpu_custom_call.1} parent=39 // pred_fallthru
          _
      $region40: #{tpu_custom_call.1} parent=5 // pred_fallthru
        _
      %p770 = scmp.le.s32.totalorder 2, %s14
      // Predicated region
      $region45: #{tpu_custom_call.1} parent=5 // pred_check
        %p771 = pneg %p770
      $region46: #{tpu_custom_call.1} parent=5 // pred_check_branch
        %773 = sbr.rel (%p771) target = $region48
      $region47: #{tpu_custom_call.1} parent=5 // pred_region
        %s774 = ssub.s32 %s14, 2
        // Predicated region
        $region49: #{tpu_custom_call.1} parent=47 // pred_check
          %p775 = pneg %p169
        $region50: #{tpu_custom_call.1} parent=47 // pred_check_branch
          %777 = sbr.rel (%p775) target = $region52
        $region51: #{tpu_custom_call.1} parent=47 // pred_region
          %s778 = sand.u32 %s154, 1
          %s779 = scalar_lea.sflag [#allocation3], %s778
          %s780 = sand.u32 %s154, 1
          %s781 = smul.addr %s780, 8
          %s782 = scalar_lea.vmem [#allocation2], %s781
          %783 = dma.done %s779, 128
        $region52: #{tpu_custom_call.1} parent=47 // pred_fallthru
          _
      $region48: #{tpu_custom_call.1} parent=5 // pred_fallthru
        _
    $region6: #{tpu_custom_call.1} parent=1 // loop_footer
      %s18 = sadd.s32 1, %s14
    $region7: #{tpu_custom_call.1} parent=1 // loop_footer_branch
      %13 = sbr.rel target = $region3
    $region8: #{tpu_custom_call.1} parent=1 // loop_exit
      _
    %784 = vsyncpa [#allocation3], 1
    %s785 = scalar_lea.sflag [#allocation3], 1
    %786 = vsyncpa %s785, 1

</llo_original>
